<compile_context>
chip_gen: v6e
topology: v6e:2x2x1
jax: 0.10.0
libtpu: 0.0.40
codegen_flags: <defaults>
</compile_context>

<pallas_src>
import functools

import numpy as np
import jax
import jax.numpy as jnp
from jax import lax
from jax.experimental import pallas as pl
from jax.experimental.pallas import tpu as pltpu


# --------------------------------------------------------------------------- #
# Kernel
# --------------------------------------------------------------------------- #
def _message_ada_agg_kernel(m_ref, s_ref, bsel_ref, bsum_ref, bias_ref,
                            out_ref, acc_ref, den_ref, *,
                            kb, fold, k_total, mask_partial):
    """One (node-tile, message-chunk) grid step.

    m_ref    : (KB, TN, C)  message tiles in native dtype, C = fold * D_pad.
    s_ref    : (KB, C, G)   scatter weights; (m_k @ s_k)[:, k*fold+s] is the
                            gating logit of the node in fold-slot s.
    bsel_ref : (KB, G, C)   0/1 selector (bf16); e @ bsel_k broadcasts e_k back
                            onto that node's D_pad-lane segment.
    bsum_ref : (G, C)  f32  sum_k bsel_k, for the denominator broadcast.
    bias_ref : (1, 1)  f32  gating bias (SMEM).
    out_ref  : (TN, C)      aggregated output tile.
    acc_ref  : (TN, C) f32  numerator accumulator (VMEM scratch).
    den_ref  : (TN, G) f32  compact denominator accumulator (VMEM scratch).
    """
    c = pl.program_id(1)
    tn, g_width = den_ref.shape

    @pl.when(c == 0)
    def _():
        acc_ref[...] = jnp.zeros_like(acc_ref)
        den_ref[...] = jnp.zeros_like(den_ref)

    # ---- compact per-node logits for this chunk (no EUP work yet) ---------- #
    cl = jnp.zeros((tn, g_width), jnp.float32)
    for k in range(kb):
        cl = cl + jnp.dot(m_ref[k], s_ref[k],
                          preferred_element_type=jnp.float32)
    cl = cl + bias_ref[0, 0]

    # e_k = exp(sigmoid(logit_k)); sigmoid via tanh: 2 EUP ops total, run ONCE
    # on the compact (TN, G) array for the whole chunk.  sigmoid is bounded so
    # no max-stabilization is needed, and den >= 1 per message (no div-by-0).
    e = jnp.exp(0.5 * jnp.tanh(0.5 * cl) + 0.5)

    if mask_partial:
        # Zero the lanes of zero-padded messages in the last (partial) chunk so
        # they contribute nothing to numerator or denominator.
        lane_k = lax.broadcasted_iota(jnp.int32, (1, g_width), 1) // fold
        valid = ((c * kb + lane_k) < k_total).astype(jnp.float32)
        e = e * valid

    # Round once to bf16 and use the same values for numerator and denominator
    # (single-pass MXU broadcast, weights still sum to one).
    e_b = e.astype(jnp.bfloat16)
    den_ref[...] += e_b.astype(jnp.float32)

    # ---- numerator: acc += broadcast(e_k) * m_k (native-dtype m, f32 acc) -- #
    for k in range(kb):
        e_bcast = jnp.dot(e_b, bsel_ref[k], preferred_element_type=jnp.float32)
        acc_ref[...] += e_bcast * m_ref[k]

    # ---- finalize ----------------------------------------------------------- #
    @pl.when(c == pl.num_programs(1) - 1)
    def _():
        den = jnp.dot(den_ref[...], bsum_ref[...],
                      preferred_element_type=jnp.float32)
        r = pl.reciprocal(den, approx=True)
        r = r * (2.0 - den * r)                       # one Newton step
        out_ref[...] = (acc_ref[...] * r).astype(out_ref.dtype)


# --------------------------------------------------------------------------- #
# Wrapper
# --------------------------------------------------------------------------- #
def _vmem_capacity_bytes():
    try:
        cap = getattr(pltpu.get_tpu_info(), "vmem_capacity_bytes", None)
        if cap:
            return int(cap)
    except Exception:
        pass
    return 64 * 1024 * 1024          # conservative (v7x-sized) fallback


def _auto_tile_rows(kb, cols, g_width, in_itemsize, out_itemsize, vmem_budget):
    """Largest node tile (multiple of 8, <= 1024) whose working set fits."""
    const_bytes = (2 * kb * cols * g_width * in_itemsize   # scatter weights
                   + 2 * kb * g_width * cols * 2           # 0/1 selector (bf16)
                   + 2 * g_width * cols * 4)                # selector sum (f32)
    per_row = (2 * kb * cols * in_itemsize     # double-buffered message block
               + 2 * cols * out_itemsize       # double-buffered output block
               + cols * 4 + g_width * 4        # acc / den scratch
               + 8 * max(cols, g_width) * 4)   # f32 temporaries headroom
    avail = max(vmem_budget - const_bytes, 8 * per_row)
    return int(min(1024, max(8, (avail // per_row) // 8 * 8)))


def message_ada_agg(M, weight, bias, *, tile_rows=None, max_chunk_messages=16):
    """MessageAdaAgg forward.  M: (K, N, D); weight: (1, D) or (D,); bias: (1,)."""
    K, N, D = M.shape
    dtype = M.dtype
    in_itemsize = jnp.dtype(dtype).itemsize
    w = jnp.asarray(weight, jnp.float32).reshape(D)
    b = jnp.asarray(bias, jnp.float32).reshape(1, 1)

    # ---- lane-dense layout --------------------------------------------------- #
    if D >= 128:
        d_pad = ((D + 127) // 128) * 128
        fold = 1
    else:
        d_pad = 1
        while d_pad < D:
            d_pad *= 2                 # smallest power-of-two (divisor of 128) >= D
        fold = 128 // d_pad
    cols = fold * d_pad

    if d_pad != D:
        M = jnp.pad(M, ((0, 0), (0, 0), (0, d_pad - D)))
        w = jnp.pad(w, (0, d_pad - D))
    n_pad = pl.cdiv(N, fold) * fold
    if n_pad != N:
        M = jnp.pad(M, ((0, 0), (0, n_pad - N), (0, 0)))
    rows = n_pad // fold
    m_folded = M.reshape(K, rows, cols)        # free row-major reshape

    # ---- K chunking (trailing "arbitrary" grid axis) -------------------------- #
    kb = max(1, min(K, 128 // fold, max_chunk_messages))
    num_chunks = int(pl.cdiv(K, kb))
    k_pad = num_chunks * kb
    mask_partial = k_pad != K
    if mask_partial:
        m_folded = jnp.pad(m_folded, ((0, k_pad - K), (0, 0), (0, 0)))
    g_width = 128                              # compact-gate lane width (kb*fold <= 128)

    # ---- gating matrices (tiny constants) -------------------------------------- #
    seg = np.arange(cols) // d_pad                                  # fold-slot per lane
    tgt = np.arange(kb)[:, None] * fold + seg[None, :]              # (KB, C)
    onehot_np = (tgt[:, :, None] == np.arange(g_width)[None, None, :])  # (KB, C, G)
    w_tiled = jnp.tile(w, fold)                                     # (C,) f32
    s_all = (jnp.asarray(onehot_np, jnp.float32)
             * w_tiled[None, :, None]).astype(dtype)                # (KB, C, G)
    bsel = jnp.asarray(np.transpose(onehot_np, (0, 2, 1)), jnp.bfloat16)  # (KB, G, C)
    bsum = jnp.asarray(np.transpose(onehot_np, (0, 2, 1)).sum(0), jnp.float32)  # (G, C)

    # ---- node tile size --------------------------------------------------------- #
    vmem_cap = _vmem_capacity_bytes()
    if tile_rows is None:
        tn = _auto_tile_rows(kb, cols, g_width, in_itemsize, in_itemsize,
                             int(vmem_cap * 0.55))
        if rows >= 16:                         # >= 2 node blocks (v7x megacore)
            tn = min(tn, max(8, ((rows + 1) // 2 + 7) // 8 * 8))
    else:
        tn = int(tile_rows)
    tn = min(tn, rows)
    if tn < rows:
        tn = max(8, (tn // 8) * 8)
    grid = (int(pl.cdiv(rows, tn)), num_chunks)

    kernel = functools.partial(_message_ada_agg_kernel, kb=kb, fold=fold,
                               k_total=K, mask_partial=mask_partial)

    out_folded = pl.pallas_call(
        kernel,
        out_shape=jax.ShapeDtypeStruct((rows, cols), dtype),
        grid_spec=pltpu.PrefetchScalarGridSpec(
            num_scalar_prefetch=0,
            grid=grid,
            in_specs=[
                pl.BlockSpec((kb, tn, cols), lambda i, c: (c, i, 0)),
                pl.BlockSpec((kb, cols, g_width), lambda i, c: (0, 0, 0)),
                pl.BlockSpec((kb, g_width, cols), lambda i, c: (0, 0, 0)),
                pl.BlockSpec((g_width, cols), lambda i, c: (0, 0)),
                pl.BlockSpec(memory_space=pltpu.MemorySpace.SMEM),
            ],
            out_specs=pl.BlockSpec((tn, cols), lambda i, c: (i, 0)),
            scratch_shapes=[
                pltpu.VMEM((tn, cols), jnp.float32),     # numerator accumulator
                pltpu.VMEM((tn, g_width), jnp.float32),  # compact denominator
            ],
        ),
        compiler_params=pltpu.CompilerParams(
            dimension_semantics=("parallel", "arbitrary"),
            vmem_limit_bytes=min(int(vmem_cap * 0.75), 100 * 1024 * 1024),
        ),
    )(m_folded, s_all, bsel, bsum, b)

    out = out_folded.reshape(n_pad, d_pad)
    return out[:N, :D]


# --------------------------------------------------------------------------- #
# Pure-JAX reference (mirrors the PyTorch module)
# --------------------------------------------------------------------------- #
def message_ada_agg_ref(M, weight, bias):
    m32 = M.astype(jnp.float32)
    logits = jnp.einsum("knd,od->kno", m32, jnp.asarray(weight, jnp.float32))
    logits = logits + jnp.asarray(bias, jnp.float32)
    soft = jax.nn.softmax(jax.nn.sigmoid(logits), axis=0)
    return jnp.sum(m32 * soft, axis=0)


if __name__ == "__main__":
    root = jax.random.PRNGKey(0)

    def make_inputs(key, K, N, D, dtype=jnp.float32):
        k_m, k_w, k_b = jax.random.split(key, 3)
        # Round values through bf16 so the comparison is insensitive to the
        # MXU's single-pass bf16 precision; values stay exactly representable.
        m = jax.random.normal(k_m, (K, N, D), jnp.float32)
        m = m.astype(jnp.bfloat16).astype(jnp.float32)
        w = jax.random.normal(k_w, (1, D), jnp.float32) / jnp.sqrt(D)
        w = w.astype(jnp.bfloat16).astype(jnp.float32)
        b = 0.1 * jax.random.normal(k_b, (1,), jnp.float32)
        return m.astype(dtype), w, b

    # Tolerances are dominated by the bf16-rounded gate broadcast (bounded:
    # |err| <= ~4e-3 * max|m|); the gate is a bounded sigmoid/softmax, so this
    # perturbation is semantically benign.
    cases = []

    # 1) Narrow feat dim (D=32 -> fold=4), single K chunk, multi-block node grid.
    m, w, b = make_inputs(root, K=4, N=512, D=32)
    out = jax.block_until_ready(message_ada_agg(m, w, b, tile_rows=32))
    cases.append(("fold_grid", out, message_ada_agg_ref(m, w, b), 2.5e-2))

    # 2) N needs padding for the fold and the last node block is partial.
    m, w, b = make_inputs(jax.random.fold_in(root, 1), K=3, N=101, D=32)
    out = jax.block_until_ready(message_ada_agg(m, w, b, tile_rows=16))
    cases.append(("fold_pad_partial", out, message_ada_agg_ref(m, w, b), 2.5e-2))

    # 3) Lane-wide feat dim (D=128): fold=1 path, auto tile (>=2 node blocks).
    m, w, b = make_inputs(jax.random.fold_in(root, 2), K=2, N=64, D=128)
    out = jax.block_until_ready(message_ada_agg(m, w, b))
    cases.append(("wide_D", out, message_ada_agg_ref(m, w, b), 2.5e-2))

    # 4) bf16 messages stay bf16 end-to-end (half the HBM traffic).
    m, w, b = make_inputs(jax.random.fold_in(root, 3), K=4, N=256, D=32,
                          dtype=jnp.bfloat16)
    out = jax.block_until_ready(message_ada_agg(m, w, b, tile_rows=32))
    cases.append(("bf16_input", out, message_ada_agg_ref(m, w, b), 4e-2))

    # 5) K spread over several "arbitrary" grid chunks incl. a masked partial one.
    m, w, b = make_inputs(jax.random.fold_in(root, 4), K=5, N=128, D=32)
    out = jax.block_until_ready(
        message_ada_agg(m, w, b, tile_rows=16, max_chunk_messages=2))
    cases.append(("k_chunked_masked", out, message_ada_agg_ref(m, w, b), 2.5e-2))

    # 6) feat dim that does not divide 128 (D=48 -> padded to 64, fold=2).
    m, w, b = make_inputs(jax.random.fold_in(root, 5), K=3, N=96, D=48)
    out = jax.block_until_ready(message_ada_agg(m, w, b))
    cases.append(("d_padded", out, message_ada_agg_ref(m, w, b), 2.5e-2))

    for name, got, ref, tol in cases:
        assert got.shape == ref.shape, (name, got.shape, ref.shape)
        err = float(jnp.max(jnp.abs(got.astype(jnp.float32) - ref)))
        assert err <= tol, f"{name}: max abs err {err:.3e} > {tol:.1e}"

    print("KERNEL_OK")
</pallas_src>

<mosaic_0001>
module attributes {stable_mosaic.version = 11 : i64} {
  func.func @_message_ada_agg_kernel(%arg0: i32, %arg1: i32, %arg2: memref<4x32x128xf32, #tpu.memory_space<vmem>>, %arg3: memref<4x128x128xf32, #tpu.memory_space<vmem>>, %arg4: memref<4x128x128xbf16, #tpu.memory_space<vmem>>, %arg5: memref<128x128xf32, #tpu.memory_space<vmem>>, %arg6: memref<1x1xf32, #tpu.memory_space<smem>>, %arg7: memref<32x128xf32, #tpu.memory_space<vmem>>, %arg8: memref<32x128xf32, #tpu.memory_space<vmem>>, %arg9: memref<32x128xf32, #tpu.memory_space<vmem>>) attributes {dimension_semantics = [#tpu.dimension_semantics<parallel>, #tpu.dimension_semantics<arbitrary>], iteration_bounds = array<i64: 4, 1>, scalar_prefetch = 0 : i64, scratch_operands = 2 : i64, tpu.core_type = #tpu.core_type<tc>, window_params = [{transform_indices = @transform_0, window_bounds = array<i64: 4, 32, 128>}, {pipeline_mode = #tpu.pipeline_mode<synchronous>, transform_indices = @transform_1, window_bounds = array<i64: 4, 128, 128>}, {pipeline_mode = #tpu.pipeline_mode<synchronous>, transform_indices = @transform_2, window_bounds = array<i64: 4, 128, 128>}, {pipeline_mode = #tpu.pipeline_mode<synchronous>, transform_indices = @transform_3, window_bounds = array<i64: 128, 128>}, {transform_indices = @transform_4, window_bounds = array<i64: 1, 1>}, {transform_indices = @transform_5, window_bounds = array<i64: 32, 128>}]} {
    %c0_i32 = arith.constant 0 : i32
    %0 = arith.cmpi eq, %arg1, %c0_i32 : i32
    %1 = arith.extui %0 : i1 to i32
    %c0_i32_0 = arith.constant 0 : i32
    %2 = arith.cmpi ne, %1, %c0_i32_0 : i32
    scf.if %2 {
      %cst_80 = arith.constant 0.000000e+00 : f32
      %83 = vector.broadcast %cst_80 : f32 to vector<32x128xf32>
      %c0_81 = arith.constant 0 : index
      %c0_82 = arith.constant 0 : index
      %84 = vector.load %arg8[%c0_81, %c0_82] : memref<32x128xf32, #tpu.memory_space<vmem>>, vector<32x128xf32>
      tpu.vector_store %arg8[%c0_81, %c0_82], %83 {strides = array<i32>} : memref<32x128xf32, #tpu.memory_space<vmem>>, vector<32x128xf32>,
      %cst_83 = arith.constant 0.000000e+00 : f32
      %85 = vector.broadcast %cst_83 : f32 to vector<32x128xf32>
      %c0_84 = arith.constant 0 : index
      %c0_85 = arith.constant 0 : index
      %86 = vector.load %arg9[%c0_84, %c0_85] : memref<32x128xf32, #tpu.memory_space<vmem>>, vector<32x128xf32>
      tpu.vector_store %arg9[%c0_84, %c0_85], %85 {strides = array<i32>} : memref<32x128xf32, #tpu.memory_space<vmem>>, vector<32x128xf32>,
    } else {
    }
    %cst = arith.constant 0.000000e+00 : f32
    %3 = vector.broadcast %cst : f32 to vector<32x128xf32>
    %c0 = arith.constant 0 : index
    %c0_1 = arith.constant 0 : index
    %c0_2 = arith.constant 0 : index
    %4 = vector.load %arg2[%c0, %c0_1, %c0_2] : memref<4x32x128xf32, #tpu.memory_space<vmem>>, vector<1x32x128xf32>
    %5 = vector.shape_cast %4 : vector<1x32x128xf32> to vector<32x128xf32>
    %c0_3 = arith.constant 0 : index
    %c0_4 = arith.constant 0 : index
    %c0_5 = arith.constant 0 : index
    %6 = vector.load %arg3[%c0_3, %c0_4, %c0_5] : memref<4x128x128xf32, #tpu.memory_space<vmem>>, vector<1x128x128xf32>
    %7 = vector.shape_cast %6 : vector<1x128x128xf32> to vector<128x128xf32>
    %cst_6 = arith.constant dense<0.000000e+00> : vector<32x128xf32>
    %8 = tpu.matmul %5, %7, %cst_6 {dimension_numbers = #tpu.dot_dimension_numbers<[1], [0], [0], [1], [0, 0, 1, 1], [], []>} : vector<32x128xf32>, vector<128x128xf32>, vector<32x128xf32> -> vector<32x128xf32>
    %9 = arith.addf %3, %8 : vector<32x128xf32>
    %c1 = arith.constant 1 : index
    %c0_7 = arith.constant 0 : index
    %c0_8 = arith.constant 0 : index
    %10 = vector.load %arg2[%c1, %c0_7, %c0_8] : memref<4x32x128xf32, #tpu.memory_space<vmem>>, vector<1x32x128xf32>
    %11 = vector.shape_cast %10 : vector<1x32x128xf32> to vector<32x128xf32>
    %c1_9 = arith.constant 1 : index
    %c0_10 = arith.constant 0 : index
    %c0_11 = arith.constant 0 : index
    %12 = vector.load %arg3[%c1_9, %c0_10, %c0_11] : memref<4x128x128xf32, #tpu.memory_space<vmem>>, vector<1x128x128xf32>
    %13 = vector.shape_cast %12 : vector<1x128x128xf32> to vector<128x128xf32>
    %cst_12 = arith.constant dense<0.000000e+00> : vector<32x128xf32>
    %14 = tpu.matmul %11, %13, %cst_12 {dimension_numbers = #tpu.dot_dimension_numbers<[1], [0], [0], [1], [0, 0, 1, 1], [], []>} : vector<32x128xf32>, vector<128x128xf32>, vector<32x128xf32> -> vector<32x128xf32>
    %15 = arith.addf %9, %14 : vector<32x128xf32>
    %c2 = arith.constant 2 : index
    %c0_13 = arith.constant 0 : index
    %c0_14 = arith.constant 0 : index
    %16 = vector.load %arg2[%c2, %c0_13, %c0_14] : memref<4x32x128xf32, #tpu.memory_space<vmem>>, vector<1x32x128xf32>
    %17 = vector.shape_cast %16 : vector<1x32x128xf32> to vector<32x128xf32>
    %c2_15 = arith.constant 2 : index
    %c0_16 = arith.constant 0 : index
    %c0_17 = arith.constant 0 : index
    %18 = vector.load %arg3[%c2_15, %c0_16, %c0_17] : memref<4x128x128xf32, #tpu.memory_space<vmem>>, vector<1x128x128xf32>
    %19 = vector.shape_cast %18 : vector<1x128x128xf32> to vector<128x128xf32>
    %cst_18 = arith.constant dense<0.000000e+00> : vector<32x128xf32>
    %20 = tpu.matmul %17, %19, %cst_18 {dimension_numbers = #tpu.dot_dimension_numbers<[1], [0], [0], [1], [0, 0, 1, 1], [], []>} : vector<32x128xf32>, vector<128x128xf32>, vector<32x128xf32> -> vector<32x128xf32>
    %21 = arith.addf %15, %20 : vector<32x128xf32>
    %c3 = arith.constant 3 : index
    %c0_19 = arith.constant 0 : index
    %c0_20 = arith.constant 0 : index
    %22 = vector.load %arg2[%c3, %c0_19, %c0_20] : memref<4x32x128xf32, #tpu.memory_space<vmem>>, vector<1x32x128xf32>
    %23 = vector.shape_cast %22 : vector<1x32x128xf32> to vector<32x128xf32>
    %c3_21 = arith.constant 3 : index
    %c0_22 = arith.constant 0 : index
    %c0_23 = arith.constant 0 : index
    %24 = vector.load %arg3[%c3_21, %c0_22, %c0_23] : memref<4x128x128xf32, #tpu.memory_space<vmem>>, vector<1x128x128xf32>
    %25 = vector.shape_cast %24 : vector<1x128x128xf32> to vector<128x128xf32>
    %cst_24 = arith.constant dense<0.000000e+00> : vector<32x128xf32>
    %26 = tpu.matmul %23, %25, %cst_24 {dimension_numbers = #tpu.dot_dimension_numbers<[1], [0], [0], [1], [0, 0, 1, 1], [], []>} : vector<32x128xf32>, vector<128x128xf32>, vector<32x128xf32> -> vector<32x128xf32>
    %27 = arith.addf %21, %26 : vector<32x128xf32>
    %c0_25 = arith.constant 0 : index
    %c0_26 = arith.constant 0 : index
    %28 = memref.load %arg6[%c0_25, %c0_26] : memref<1x1xf32, #tpu.memory_space<smem>>
    %29 = vector.broadcast %28 : f32 to vector<32x128xf32>
    %30 = arith.addf %27, %29 : vector<32x128xf32>
    %cst_27 = arith.constant 5.000000e-01 : f32
    %31 = vector.broadcast %cst_27 : f32 to vector<32x128xf32>
    %32 = arith.mulf %31, %30 : vector<32x128xf32>
    %33 = math.tanh %32 : vector<32x128xf32>
    %cst_28 = arith.constant 5.000000e-01 : f32
    %34 = vector.broadcast %cst_28 : f32 to vector<32x128xf32>
    %35 = arith.mulf %34, %33 : vector<32x128xf32>
    %cst_29 = arith.constant 5.000000e-01 : f32
    %36 = vector.broadcast %cst_29 : f32 to vector<32x128xf32>
    %37 = arith.addf %35, %36 : vector<32x128xf32>
    %38 = math.exp %37 : vector<32x128xf32>
    %39 = arith.truncf %38 : vector<32x128xf32> to vector<32x128xbf16>
    %c0_30 = arith.constant 0 : index
    %c0_31 = arith.constant 0 : index
    %40 = vector.load %arg9[%c0_30, %c0_31] : memref<32x128xf32, #tpu.memory_space<vmem>>, vector<32x128xf32>
    %41 = arith.extf %39 : vector<32x128xbf16> to vector<32x128xf32>
    %42 = arith.addf %40, %41 : vector<32x128xf32>
    %c0_32 = arith.constant 0 : index
    %c0_33 = arith.constant 0 : index
    %43 = vector.load %arg9[%c0_32, %c0_33] : memref<32x128xf32, #tpu.memory_space<vmem>>, vector<32x128xf32>
    tpu.vector_store %arg9[%c0_32, %c0_33], %42 {strides = array<i32>} : memref<32x128xf32, #tpu.memory_space<vmem>>, vector<32x128xf32>,
    %c0_34 = arith.constant 0 : index
    %c0_35 = arith.constant 0 : index
    %c0_36 = arith.constant 0 : index
    %44 = vector.load %arg4[%c0_34, %c0_35, %c0_36] : memref<4x128x128xbf16, #tpu.memory_space<vmem>>, vector<1x128x128xbf16>
    %45 = vector.shape_cast %44 : vector<1x128x128xbf16> to vector<128x128xbf16>
    %cst_37 = arith.constant dense<0.000000e+00> : vector<32x128xf32>
    %46 = tpu.matmul %39, %45, %cst_37 {dimension_numbers = #tpu.dot_dimension_numbers<[1], [0], [0], [1], [0, 0, 1, 1], [], []>} : vector<32x128xbf16>, vector<128x128xbf16>, vector<32x128xf32> -> vector<32x128xf32>
    %c0_38 = arith.constant 0 : index
    %c0_39 = arith.constant 0 : index
    %47 = vector.load %arg8[%c0_38, %c0_39] : memref<32x128xf32, #tpu.memory_space<vmem>>, vector<32x128xf32>
    %c0_40 = arith.constant 0 : index
    %c0_41 = arith.constant 0 : index
    %c0_42 = arith.constant 0 : index
    %48 = vector.load %arg2[%c0_40, %c0_41, %c0_42] : memref<4x32x128xf32, #tpu.memory_space<vmem>>, vector<1x32x128xf32>
    %49 = vector.shape_cast %48 : vector<1x32x128xf32> to vector<32x128xf32>
    %50 = arith.mulf %46, %49 : vector<32x128xf32>
    %51 = arith.addf %47, %50 : vector<32x128xf32>
    %c0_43 = arith.constant 0 : index
    %c0_44 = arith.constant 0 : index
    %52 = vector.load %arg8[%c0_43, %c0_44] : memref<32x128xf32, #tpu.memory_space<vmem>>, vector<32x128xf32>
    tpu.vector_store %arg8[%c0_43, %c0_44], %51 {strides = array<i32>} : memref<32x128xf32, #tpu.memory_space<vmem>>, vector<32x128xf32>,
    %c1_45 = arith.constant 1 : index
    %c0_46 = arith.constant 0 : index
    %c0_47 = arith.constant 0 : index
    %53 = vector.load %arg4[%c1_45, %c0_46, %c0_47] : memref<4x128x128xbf16, #tpu.memory_space<vmem>>, vector<1x128x128xbf16>
    %54 = vector.shape_cast %53 : vector<1x128x128xbf16> to vector<128x128xbf16>
    %cst_48 = arith.constant dense<0.000000e+00> : vector<32x128xf32>
    %55 = tpu.matmul %39, %54, %cst_48 {dimension_numbers = #tpu.dot_dimension_numbers<[1], [0], [0], [1], [0, 0, 1, 1], [], []>} : vector<32x128xbf16>, vector<128x128xbf16>, vector<32x128xf32> -> vector<32x128xf32>
    %c0_49 = arith.constant 0 : index
    %c0_50 = arith.constant 0 : index
    %56 = vector.load %arg8[%c0_49, %c0_50] : memref<32x128xf32, #tpu.memory_space<vmem>>, vector<32x128xf32>
    %c1_51 = arith.constant 1 : index
    %c0_52 = arith.constant 0 : index
    %c0_53 = arith.constant 0 : index
    %57 = vector.load %arg2[%c1_51, %c0_52, %c0_53] : memref<4x32x128xf32, #tpu.memory_space<vmem>>, vector<1x32x128xf32>
    %58 = vector.shape_cast %57 : vector<1x32x128xf32> to vector<32x128xf32>
    %59 = arith.mulf %55, %58 : vector<32x128xf32>
    %60 = arith.addf %56, %59 : vector<32x128xf32>
    %c0_54 = arith.constant 0 : index
    %c0_55 = arith.constant 0 : index
    %61 = vector.load %arg8[%c0_54, %c0_55] : memref<32x128xf32, #tpu.memory_space<vmem>>, vector<32x128xf32>
    tpu.vector_store %arg8[%c0_54, %c0_55], %60 {strides = array<i32>} : memref<32x128xf32, #tpu.memory_space<vmem>>, vector<32x128xf32>,
    %c2_56 = arith.constant 2 : index
    %c0_57 = arith.constant 0 : index
    %c0_58 = arith.constant 0 : index
    %62 = vector.load %arg4[%c2_56, %c0_57, %c0_58] : memref<4x128x128xbf16, #tpu.memory_space<vmem>>, vector<1x128x128xbf16>
    %63 = vector.shape_cast %62 : vector<1x128x128xbf16> to vector<128x128xbf16>
    %cst_59 = arith.constant dense<0.000000e+00> : vector<32x128xf32>
    %64 = tpu.matmul %39, %63, %cst_59 {dimension_numbers = #tpu.dot_dimension_numbers<[1], [0], [0], [1], [0, 0, 1, 1], [], []>} : vector<32x128xbf16>, vector<128x128xbf16>, vector<32x128xf32> -> vector<32x128xf32>
    %c0_60 = arith.constant 0 : index
    %c0_61 = arith.constant 0 : index
    %65 = vector.load %arg8[%c0_60, %c0_61] : memref<32x128xf32, #tpu.memory_space<vmem>>, vector<32x128xf32>
    %c2_62 = arith.constant 2 : index
    %c0_63 = arith.constant 0 : index
    %c0_64 = arith.constant 0 : index
    %66 = vector.load %arg2[%c2_62, %c0_63, %c0_64] : memref<4x32x128xf32, #tpu.memory_space<vmem>>, vector<1x32x128xf32>
    %67 = vector.shape_cast %66 : vector<1x32x128xf32> to vector<32x128xf32>
    %68 = arith.mulf %64, %67 : vector<32x128xf32>
    %69 = arith.addf %65, %68 : vector<32x128xf32>
    %c0_65 = arith.constant 0 : index
    %c0_66 = arith.constant 0 : index
    %70 = vector.load %arg8[%c0_65, %c0_66] : memref<32x128xf32, #tpu.memory_space<vmem>>, vector<32x128xf32>
    tpu.vector_store %arg8[%c0_65, %c0_66], %69 {strides = array<i32>} : memref<32x128xf32, #tpu.memory_space<vmem>>, vector<32x128xf32>,
    %c3_67 = arith.constant 3 : index
    %c0_68 = arith.constant 0 : index
    %c0_69 = arith.constant 0 : index
    %71 = vector.load %arg4[%c3_67, %c0_68, %c0_69] : memref<4x128x128xbf16, #tpu.memory_space<vmem>>, vector<1x128x128xbf16>
    %72 = vector.shape_cast %71 : vector<1x128x128xbf16> to vector<128x128xbf16>
    %cst_70 = arith.constant dense<0.000000e+00> : vector<32x128xf32>
    %73 = tpu.matmul %39, %72, %cst_70 {dimension_numbers = #tpu.dot_dimension_numbers<[1], [0], [0], [1], [0, 0, 1, 1], [], []>} : vector<32x128xbf16>, vector<128x128xbf16>, vector<32x128xf32> -> vector<32x128xf32>
    %c0_71 = arith.constant 0 : index
    %c0_72 = arith.constant 0 : index
    %74 = vector.load %arg8[%c0_71, %c0_72] : memref<32x128xf32, #tpu.memory_space<vmem>>, vector<32x128xf32>
    %c3_73 = arith.constant 3 : index
    %c0_74 = arith.constant 0 : index
    %c0_75 = arith.constant 0 : index
    %75 = vector.load %arg2[%c3_73, %c0_74, %c0_75] : memref<4x32x128xf32, #tpu.memory_space<vmem>>, vector<1x32x128xf32>
    %76 = vector.shape_cast %75 : vector<1x32x128xf32> to vector<32x128xf32>
    %77 = arith.mulf %73, %76 : vector<32x128xf32>
    %78 = arith.addf %74, %77 : vector<32x128xf32>
    %c0_76 = arith.constant 0 : index
    %c0_77 = arith.constant 0 : index
    %79 = vector.load %arg8[%c0_76, %c0_77] : memref<32x128xf32, #tpu.memory_space<vmem>>, vector<32x128xf32>
    tpu.vector_store %arg8[%c0_76, %c0_77], %78 {strides = array<i32>} : memref<32x128xf32, #tpu.memory_space<vmem>>, vector<32x128xf32>,
    %c0_i32_78 = arith.constant 0 : i32
    %80 = arith.cmpi eq, %arg1, %c0_i32_78 : i32
    %81 = arith.extui %80 : i1 to i32
    %c0_i32_79 = arith.constant 0 : i32
    %82 = arith.cmpi ne, %81, %c0_i32_79 : i32
    scf.if %82 {
      %c0_80 = arith.constant 0 : index
      %c0_81 = arith.constant 0 : index
      %83 = vector.load %arg9[%c0_80, %c0_81] : memref<32x128xf32, #tpu.memory_space<vmem>>, vector<32x128xf32>
      %c0_82 = arith.constant 0 : index
      %c0_83 = arith.constant 0 : index
      %84 = vector.load %arg5[%c0_82, %c0_83] : memref<128x128xf32, #tpu.memory_space<vmem>>, vector<128x128xf32>
      %cst_84 = arith.constant dense<0.000000e+00> : vector<32x128xf32>
      %85 = tpu.matmul %83, %84, %cst_84 {dimension_numbers = #tpu.dot_dimension_numbers<[1], [0], [0], [1], [0, 0, 1, 1], [], []>} : vector<32x128xf32>, vector<128x128xf32>, vector<32x128xf32> -> vector<32x128xf32>
      %86 = tpu.reciprocal %85 {approx = true} : vector<32x128xf32> -> vector<32x128xf32>
      %87 = arith.mulf %85, %86 : vector<32x128xf32>
      %cst_85 = arith.constant 2.000000e+00 : f32
      %88 = vector.broadcast %cst_85 : f32 to vector<32x128xf32>
      %89 = arith.subf %88, %87 : vector<32x128xf32>
      %90 = arith.mulf %86, %89 : vector<32x128xf32>
      %c0_86 = arith.constant 0 : index
      %c0_87 = arith.constant 0 : index
      %91 = vector.load %arg8[%c0_86, %c0_87] : memref<32x128xf32, #tpu.memory_space<vmem>>, vector<32x128xf32>
      %92 = arith.mulf %91, %90 : vector<32x128xf32>
      %c0_88 = arith.constant 0 : index
      %c0_89 = arith.constant 0 : index
      %93 = vector.load %arg7[%c0_88, %c0_89] : memref<32x128xf32, #tpu.memory_space<vmem>>, vector<32x128xf32>
      tpu.vector_store %arg7[%c0_88, %c0_89], %92 {strides = array<i32>} : memref<32x128xf32, #tpu.memory_space<vmem>>, vector<32x128xf32>,
    } else {
    }
    return
  }
  func.func @transform_0(%arg0: i32, %arg1: i32) -> (i32, i32, i32) {
    %c0_i32 = arith.constant 0 : i32
    %c0_i32_0 = arith.constant 0 : i32
    return %arg1, %arg0, %c0_i32 : i32, i32, i32
  }
  func.func @transform_1(%arg0: i32, %arg1: i32) -> (i32, i32, i32) {
    %c0_i32 = arith.constant 0 : i32
    %c0_i32_0 = arith.constant 0 : i32
    %c0_i32_1 = arith.constant 0 : i32
    %c0_i32_2 = arith.constant 0 : i32
    return %c0_i32, %c0_i32_0, %c0_i32_1 : i32, i32, i32
  }
  func.func @transform_2(%arg0: i32, %arg1: i32) -> (i32, i32, i32) {
    %c0_i32 = arith.constant 0 : i32
    %c0_i32_0 = arith.constant 0 : i32
    %c0_i32_1 = arith.constant 0 : i32
    %c0_i32_2 = arith.constant 0 : i32
    return %c0_i32, %c0_i32_0, %c0_i32_1 : i32, i32, i32
  }
  func.func @transform_3(%arg0: i32, %arg1: i32) -> (i32, i32) {
    %c0_i32 = arith.constant 0 : i32
    %c0_i32_0 = arith.constant 0 : i32
    %c0_i32_1 = arith.constant 0 : i32
    return %c0_i32, %c0_i32_0 : i32, i32
  }
  func.func @transform_4(%arg0: i32, %arg1: i32) -> (i32, i32) {
    %c0_i32 = arith.constant 0 : i32
    %c0_i32_0 = arith.constant 0 : i32
    %c0_i32_1 = arith.constant 0 : i32
    return %c0_i32, %c0_i32_0 : i32, i32
  }
  func.func @transform_5(%arg0: i32, %arg1: i32) -> (i32, i32) {
    %c0_i32 = arith.constant 0 : i32
    %c0_i32_0 = arith.constant 0 : i32
    return %arg0, %c0_i32 : i32, i32
  }
}

</mosaic_0001>

<llo_original>
// kernel: tpu_custom_call.1
$region0: #{tpu_custom_call.1}
  #allocation0 [shape = 'u32[]', space=smem, size = 0x4, offset = 0x4, fixed_abs, tag = 'smem constant byte address 0x4 - core index']
  #allocation1 [shape = 'u32[144,128]{1,0:T(1,128)}', space=vmem, size = 0x12000, scoped, tag = 'internal scratch']
  #allocation2 [shape = 'f32[32,128]{1,0:T(8,128)}', space=vmem, size = 0x4000, scoped, tag = 'scratch operand']
  #allocation3 [shape = 'f32[32,128]{1,0:T(8,128)}', space=vmem, size = 0x4000, scoped, tag = 'scratch operand']
  #allocation4 [shape = 'f32[1,1]{1,0:T(1,128)S(6)}', space=smem, size = 0x200, scoped, tag = 'scoped memory for tpu_custom_call.1']
  #allocation14 [shape = 's32[]', space=sflag, size = 0x4, offset = 0, fixed_abs, tag = 'sflag constant byte address 0x0 - dummy sync flag']
  %s0 = inlined_call_operand.hbm [shape: f32[4,128,128], index: 0, kind: input, shape index: {}]
  %s1 = inlined_call_operand.hbm [shape: f32[4,128,128], index: 1, kind: input, shape index: {}]
  %s2 = inlined_call_operand.hbm [shape: bf16[4,128,128], index: 2, kind: input, shape index: {}]
  %s3 = inlined_call_operand.hbm [shape: f32[128,128], index: 3, kind: input, shape index: {}]
  %s4 = inlined_call_operand.<no memory space> [shape: f32[1,1], index: 4, kind: input, shape index: {}]
  %s5 = inlined_call_operand.hbm [shape: f32[128,128], index: 5, kind: output, shape index: {}]
  %s6 = sld [smem:[#allocation0]]
  $region77: #{tpu_custom_call.1} parent=0
    _
  %s8 = ssub.s32 1, %s6
  %s9 = scalar_select 0, %s8, %s6
  %10 = sst [smem:[#allocation4]] %s4
  $region1: #{tpu_custom_call.1} parent=0
    #allocation5 [shape = 'u8[131072]{0}', space=vmem, size = 0x20000, scoped, tag = 'input window, operand 0']
    #allocation6 [shape = 's32[2]{0}', space=sflag, size = 0x8, scoped, tag = 'scoped memory for tpu_custom_call.1']
    #allocation7 [shape = 's32[2]{0}', space=sflag, size = 0x8, scoped, tag = 'scoped memory for tpu_custom_call.1']
    #allocation8 [shape = 'u8[262144]{0}', space=vmem, size = 0x40000, scoped, tag = 'input window, operand 1, single buffered']
    #allocation9 [shape = 's32[1]{0}', space=sflag, size = 0x4, scoped, tag = 'scoped memory for tpu_custom_call.1']
    #allocation10 [shape = 'u8[131072]{0}', space=vmem, size = 0x20000, scoped, tag = 'input window, operand 2, single buffered']
    #allocation11 [shape = 'u8[65536]{0}', space=vmem, size = 0x10000, scoped, tag = 'input window, operand 3, single buffered']
    #allocation12 [shape = 's32[1]{0}', space=sflag, size = 0x4, scoped, tag = 'scoped memory for tpu_custom_call.1']
    #allocation13 [shape = 'u8[32768]{0}', space=vmem, size = 0x8000, scoped, tag = 'output window, operand 0']
    %11 = vsyncpa [#allocation6], 0
    %s12 = scalar_lea.sflag [#allocation6], 1
    %13 = vsyncpa %s12, 0
    %14 = vsyncpa [#allocation9], 0
    %15 = vsyncpa [#allocation12], 0
    %16 = vsyncpa [#allocation7], 0
    %s17 = scalar_lea.sflag [#allocation7], 1
    %18 = vsyncpa %s17, 0
    loop: start=0, step=1, limit=6
    $region2: #{tpu_custom_call.1} parent=1 // loop_pre_header
      _
    $region3: #{tpu_custom_call.1} parent=1 // loop_header
      %s20 = sphi 0, %s24
      %p21 = scmp.ge.s32.totalorder %s20, 6
      %s27 = sphi 0, %s39
      %s28 = sphi 0, %s35
      %s29 = sphi 0, %s27
      %s30 = sphi 0, %s28
      %s31 = sphi 0, %s29
      %s32 = sphi 0, %s30
      %s44 = sphi 0, %s46
      %s47 = sphi 0, %s44
      %s48 = sphi 0, %s47
      %s64 = sphi 0, %s48
      %s68 = sphi 0, %s68
      %s70 = sphi 0, %s68
      %s71 = sphi 0, %s70
      %s85 = sphi 0, %s71
      %s89 = sphi 0, %s89
      %s91 = sphi 0, %s89
      %s92 = sphi 0, %s91
      %s106 = sphi 0, %s92
      %s110 = sphi 0, %s110
      %s112 = sphi 0, %s110
      %s113 = sphi 0, %s112
      %s127 = sphi 0, %s113
      %s131 = sphi 0, %s131
      %s133 = sphi 0, %s131
      %s134 = sphi 0, %s133
      %s148 = sphi 0, %s134
      %s154 = sphi 0, %s156
      %s157 = sphi 0, %s154
      %s158 = sphi 0, %s157
      %s174 = sphi 0, %s158
    $region4: #{tpu_custom_call.1} parent=1 // loop_header_branch
      %23 = sbr.rel (%p21) target = $region8
    $region5: #{tpu_custom_call.1} parent=1 // loop_body
      %s25 = ssub.s32 %s20, 1
      %s26 = ssub.s32 %s20, 2
      %s33 = sadd.s32 1, %s28
      %p34 = scmp.ge.s32.totalorder %s33, 1
      %s35 = scalar_select %p34, 0, %s33
      %s36 = sadd.s32 1, %s27
      %s37 = scalar_select %p34, %s36, %s27
      %p38 = scmp.ge.s32.totalorder %s37, 4
      %s39 = scalar_select %p38, 0, %s37
      %s40 = ssub.s32 %s28, %s35
      %s41 = ssub.s32 %s27, %s39
      %s42 = sor.u32 %s40, %s41
      %p43 = scmp.eq.s32.totalorder %s42, 0
      %s45 = sadd.s32 %s44, 1
      %s46 = scalar_select %p43, %s44, %s45
      %p49 = pneg %p43
      %p50 = scmp.eq.s32.totalorder %s20, 3
      %p51 = por %p49, %p50
      %p52 = scmp.ne.s32.totalorder %s44, %s47
      %p53 = scmp.eq.s32.totalorder %s20, 0
      %p54 = por %p52, %p53
      %p55 = scmp.ne.s32.totalorder %s44, %s47
      %p56 = scmp.eq.s32.totalorder %s25, 3
      %p57 = por %p55, %p56
      %p58 = scmp.ne.s32.totalorder %s47, %s48
      %p59 = scmp.eq.s32.totalorder %s25, 0
      %p60 = por %p58, %p59
      %p61 = scmp.ne.s32.totalorder %s47, %s48
      %p62 = scmp.eq.s32.totalorder %s26, 3
      %p63 = por %p61, %p62
      %p65 = scmp.ne.s32.totalorder %s48, %s64
      %p66 = scmp.eq.s32.totalorder %s26, 0
      %p67 = por %p65, %p66
      %s69 = sadd.s32 %s68, 1
      %p72 = scmp.eq.s32.totalorder %s20, 3
      %p73 = scmp.ne.s32.totalorder %s68, %s70
      %p74 = scmp.eq.s32.totalorder %s20, 0
      %p75 = por %p73, %p74
      %p76 = scmp.ne.s32.totalorder %s68, %s70
      %p77 = scmp.eq.s32.totalorder %s25, 3
      %p78 = por %p76, %p77
      %p79 = scmp.ne.s32.totalorder %s70, %s71
      %p80 = scmp.eq.s32.totalorder %s25, 0
      %p81 = por %p79, %p80
      %p82 = scmp.ne.s32.totalorder %s70, %s71
      %p83 = scmp.eq.s32.totalorder %s26, 3
      %p84 = por %p82, %p83
      %p86 = scmp.ne.s32.totalorder %s71, %s85
      %p87 = scmp.eq.s32.totalorder %s26, 0
      %p88 = por %p86, %p87
      %s90 = sadd.s32 %s89, 1
      %p93 = scmp.eq.s32.totalorder %s20, 3
      %p94 = scmp.ne.s32.totalorder %s89, %s91
      %p95 = scmp.eq.s32.totalorder %s20, 0
      %p96 = por %p94, %p95
      %p97 = scmp.ne.s32.totalorder %s89, %s91
      %p98 = scmp.eq.s32.totalorder %s25, 3
      %p99 = por %p97, %p98
      %p100 = scmp.ne.s32.totalorder %s91, %s92
      %p101 = scmp.eq.s32.totalorder %s25, 0
      %p102 = por %p100, %p101
      %p103 = scmp.ne.s32.totalorder %s91, %s92
      %p104 = scmp.eq.s32.totalorder %s26, 3
      %p105 = por %p103, %p104
      %p107 = scmp.ne.s32.totalorder %s92, %s106
      %p108 = scmp.eq.s32.totalorder %s26, 0
      %p109 = por %p107, %p108
      %s111 = sadd.s32 %s110, 1
      %p114 = scmp.eq.s32.totalorder %s20, 3
      %p115 = scmp.ne.s32.totalorder %s110, %s112
      %p116 = scmp.eq.s32.totalorder %s20, 0
      %p117 = por %p115, %p116
      %p118 = scmp.ne.s32.totalorder %s110, %s112
      %p119 = scmp.eq.s32.totalorder %s25, 3
      %p120 = por %p118, %p119
      %p121 = scmp.ne.s32.totalorder %s112, %s113
      %p122 = scmp.eq.s32.totalorder %s25, 0
      %p123 = por %p121, %p122
      %p124 = scmp.ne.s32.totalorder %s112, %s113
      %p125 = scmp.eq.s32.totalorder %s26, 3
      %p126 = por %p124, %p125
      %p128 = scmp.ne.s32.totalorder %s113, %s127
      %p129 = scmp.eq.s32.totalorder %s26, 0
      %p130 = por %p128, %p129
      %s132 = sadd.s32 %s131, 1
      %p135 = scmp.eq.s32.totalorder %s20, 3
      %p136 = scmp.ne.s32.totalorder %s131, %s133
      %p137 = scmp.eq.s32.totalorder %s20, 0
      %p138 = por %p136, %p137
      %p139 = scmp.ne.s32.totalorder %s131, %s133
      %p140 = scmp.eq.s32.totalorder %s25, 3
      %p141 = por %p139, %p140
      %p142 = scmp.ne.s32.totalorder %s133, %s134
      %p143 = scmp.eq.s32.totalorder %s25, 0
      %p144 = por %p142, %p143
      %p145 = scmp.ne.s32.totalorder %s133, %s134
      %p146 = scmp.eq.s32.totalorder %s26, 3
      %p147 = por %p145, %p146
      %p149 = scmp.ne.s32.totalorder %s134, %s148
      %p150 = scmp.eq.s32.totalorder %s26, 0
      %p151 = por %p149, %p150
      %s152 = ssub.s32 %s27, %s39
      %p153 = scmp.eq.s32.totalorder %s152, 0
      %s155 = sadd.s32 %s154, 1
      %s156 = scalar_select %p153, %s154, %s155
      %p159 = pneg %p153
      %p160 = scmp.eq.s32.totalorder %s20, 3
      %p161 = por %p159, %p160
      %p162 = scmp.ne.s32.totalorder %s154, %s157
      %p163 = scmp.eq.s32.totalorder %s20, 0
      %p164 = por %p162, %p163
      %p165 = scmp.ne.s32.totalorder %s154, %s157
      %p166 = scmp.eq.s32.totalorder %s25, 3
      %p167 = por %p165, %p166
      %p168 = scmp.ne.s32.totalorder %s157, %s158
      %p169 = scmp.eq.s32.totalorder %s25, 0
      %p170 = por %p168, %p169
      %p171 = scmp.ne.s32.totalorder %s157, %s158
      %p172 = scmp.eq.s32.totalorder %s26, 3
      %p173 = por %p171, %p172
      %p175 = scmp.ne.s32.totalorder %s158, %s174
      %p176 = scmp.eq.s32.totalorder %s26, 0
      %p177 = por %p175, %p176
      %p178 = scmp.le.s32.totalorder 1, %s20
      %p179 = scmp.lt.s32.totalorder %s20, 5
      %p180 = pnand %p178, %p179
      %p181 = pneg %p180
      // Predicated region
      $region9: #{tpu_custom_call.1} parent=5 // pred_check
        _
      $region10: #{tpu_custom_call.1} parent=5 // pred_check_branch
        %183 = sbr.rel (%p180) target = $region12
      $region11: #{tpu_custom_call.1} parent=5 // pred_region
        %s184 = ssub.s32 %s20, 1
        // Predicated region
        $region13: #{tpu_custom_call.1} parent=11 // pred_check
          %p185 = pneg %p81
        $region14: #{tpu_custom_call.1} parent=11 // pred_check_branch
          %187 = sbr.rel (%p185) target = $region16
        $region15: #{tpu_custom_call.1} parent=11 // pred_region
          %s189 = ssub.s32 8192, 8192
          %190 = vsyncadd [#allocation9], %s189
          %s191 = sshll.u32 [#allocation8], 4
          %s192 = int_to_ptr.vmem [resolvable:$true] %s191
          %197 = dma.hbm_to_vmem [thread:$0]  %s1, 8192, %s192, [#allocation9], 128, 128, 8
        $region16: #{tpu_custom_call.1} parent=11 // pred_fallthru
          _
        // Predicated region
        $region17: #{tpu_custom_call.1} parent=11 // pred_check
          %p198 = pneg %p102
        $region18: #{tpu_custom_call.1} parent=11 // pred_check_branch
          %200 = sbr.rel (%p198) target = $region20
        $region19: #{tpu_custom_call.1} parent=11 // pred_region
          %s202 = ssub.s32 4096, 4096
          %203 = vsyncadd [#allocation9], %s202
          %s204 = sshll.u32 [#allocation10], 4
          %s205 = int_to_ptr.vmem [resolvable:$true] %s204
          %210 = dma.hbm_to_vmem [thread:$0]  %s2, 4096, %s205, [#allocation9], 64, 64, 4
        $region20: #{tpu_custom_call.1} parent=11 // pred_fallthru
          _
        // Predicated region
        $region21: #{tpu_custom_call.1} parent=11 // pred_check
          %p211 = pneg %p123
        $region22: #{tpu_custom_call.1} parent=11 // pred_check_branch
          %213 = sbr.rel (%p211) target = $region24
        $region23: #{tpu_custom_call.1} parent=11 // pred_region
          %s215 = ssub.s32 2048, 2048
          %216 = vsyncadd [#allocation12], %s215
          %s217 = sshll.u32 [#allocation11], 4
          %s218 = int_to_ptr.vmem [resolvable:$true] %s217
          %223 = dma.hbm_to_vmem [thread:$0]  %s3, 2048, %s218, [#allocation12], 128, 128, 8
        $region24: #{tpu_custom_call.1} parent=11 // pred_fallthru
          _
        // Predicated region
        $region25: #{tpu_custom_call.1} parent=11 // pred_check
          %p224 = pneg %p144
        $region26: #{tpu_custom_call.1} parent=11 // pred_check_branch
          %226 = sbr.rel (%p224) target = $region28
        $region27: #{tpu_custom_call.1} parent=11 // pred_region
          _
        $region28: #{tpu_custom_call.1} parent=11 // pred_fallthru
          _
      $region12: #{tpu_custom_call.1} parent=5 // pred_fallthru
        _
      %p227 = scmp.lt.s32.totalorder %s20, 4
      // Predicated region
      $region29: #{tpu_custom_call.1} parent=5 // pred_check
        %p228 = pneg %p227
      $region30: #{tpu_custom_call.1} parent=5 // pred_check_branch
        %230 = sbr.rel (%p228) target = $region32
      $region31: #{tpu_custom_call.1} parent=5 // pred_region
        // Predicated region
        $region33: #{tpu_custom_call.1} parent=31 // pred_check
          %p231 = pneg %p54
        $region34: #{tpu_custom_call.1} parent=31 // pred_check_branch
          %233 = sbr.rel (%p231) target = $region36
        $region35: #{tpu_custom_call.1} parent=31 // pred_region
          #allocation15 [shape = 'u32[6]{0}', space=smem, size = 0x18, scoped, tag = 'DMA stride descriptor']
          %s234 = sand.u32 %s44, 1
          %s235 = scalar_lea.sflag [#allocation6], %s234
          %s236 = sand.u32 %s44, 1
          %s237 = smul.addr %s236, 128
          %s238 = scalar_lea.vmem [#allocation5], %s237
          %s239 = smul.u32 4, %s28
          %s240 = smul.u32 4, %s27
          %s242 = ssub.s32 2048, 2048
          %243 = vsyncadd %s235, %s242
          %s244 = smul.addr %s239, 16
          %s245 = sadd.s32 %s240, %s244
          %s246 = smul.addr %s245, 128
          %s247 = scalar_lea.hbm %s0, %s246
          %s249 = sshll.u32 1, 14
          %s250 = sxor.u32 4294967295, %s249
          %s252 = sld [smem:[#allocation0]]
          %s253 = sadd.s32 2, %s252
          %s255 = sshll.u32 7, 26
          %s256 = sxor.u32 4294967295, %s255
          %s257 = sand.u32 0, %s256
          %s258 = sshll.u32 %s253, 26
          %s259 = sor.u32 %s257, %s258
          %s260 = sshll.u32 %s238, 4
          %s261 = int_to_ptr.vmem [resolvable:$true] %s260
          %267 = sst [smem:[#allocation15]] 2048
          %s268 = scalar_lea.smem [#allocation15], 1
          %269 = sst [smem:[%s268]] 512
          %s270 = scalar_lea.smem [#allocation15], 2
          %271 = sst [smem:[%s270]] 4
          %s272 = scalar_lea.smem [#allocation15], 3
          %273 = sst [smem:[%s272]] 128
          %s274 = scalar_lea.smem [#allocation15], 4
          %275 = sst [smem:[%s274]] 128
          %s276 = scalar_lea.smem [#allocation15], 5
          %277 = sst [smem:[%s276]] 8
          %279 = dma.general %s247, 2048, %s261, %s235, 131072, [#allocation15], %s259, 0
        $region36: #{tpu_custom_call.1} parent=31 // pred_fallthru
          _
      $region32: #{tpu_custom_call.1} parent=5 // pred_fallthru
        _
      %p280 = scmp.le.s32.totalorder 1, %s20
      %p281 = scmp.lt.s32.totalorder %s20, 5
      %p282 = pnand %p280, %p281
      %p283 = pneg %p282
      // Predicated region
      $region37: #{tpu_custom_call.1} parent=5 // pred_check
        _
      $region38: #{tpu_custom_call.1} parent=5 // pred_check_branch
        %285 = sbr.rel (%p282) target = $region40
      $region39: #{tpu_custom_call.1} parent=5 // pred_region
        %s286 = ssub.s32 %s20, 1
        %s287 = sand.u32 %s47, 1
        %s288 = scalar_lea.sflag [#allocation6], %s287
        %s289 = sand.u32 %s47, 1
        %s290 = smul.addr %s289, 128
        %s291 = scalar_lea.vmem [#allocation5], %s290
        // Predicated region
        $region41: #{tpu_custom_call.1} parent=39 // pred_check
          %p292 = pneg %p60
        $region42: #{tpu_custom_call.1} parent=39 // pred_check_branch
          %294 = sbr.rel (%p292) target = $region44
        $region43: #{tpu_custom_call.1} parent=39 // pred_region
          %295 = dma.done %s288, 2048
        $region44: #{tpu_custom_call.1} parent=39 // pred_fallthru
          _
        // Predicated region
        $region45: #{tpu_custom_call.1} parent=39 // pred_check
          %p296 = pneg %p81
        $region46: #{tpu_custom_call.1} parent=39 // pred_check_branch
          %298 = sbr.rel (%p296) target = $region48
        $region47: #{tpu_custom_call.1} parent=39 // pred_region
          %299 = dma.done [#allocation9], 8192
        $region48: #{tpu_custom_call.1} parent=39 // pred_fallthru
          _
        // Predicated region
        $region49: #{tpu_custom_call.1} parent=39 // pred_check
          %p300 = pneg %p102
        $region50: #{tpu_custom_call.1} parent=39 // pred_check_branch
          %302 = sbr.rel (%p300) target = $region52
        $region51: #{tpu_custom_call.1} parent=39 // pred_region
          %303 = dma.done [#allocation9], 4096
        $region52: #{tpu_custom_call.1} parent=39 // pred_fallthru
          _
        // Predicated region
        $region53: #{tpu_custom_call.1} parent=39 // pred_check
          %p304 = pneg %p123
        $region54: #{tpu_custom_call.1} parent=39 // pred_check_branch
          %306 = sbr.rel (%p304) target = $region56
        $region55: #{tpu_custom_call.1} parent=39 // pred_region
          %307 = dma.done [#allocation12], 2048
        $region56: #{tpu_custom_call.1} parent=39 // pred_fallthru
          _
        %s308 = sand.u32 %s47, 1
        %s309 = scalar_lea.sflag [#allocation6], %s308
        %s310 = sand.u32 %s47, 1
        %s311 = smul.addr %s310, 128
        %s312 = scalar_lea.vmem [#allocation5], %s311
        %p313 = pneg %p60
        %p314 = pneg %p57
        %p315 = pneg %p81
        %p316 = pneg %p78
        %p317 = pneg %p102
        %p318 = pneg %p99
        %p319 = pneg %p123
        %p320 = pneg %p120
        %p321 = pneg %p144
        %p322 = pneg %p141
        %p323 = pneg %p170
        %p324 = pneg %p167
        %s325 = sand.u32 %s157, 1
        %s326 = scalar_lea.sflag [#allocation7], %s325
        %s327 = sand.u32 %s157, 1
        %s328 = smul.addr %s327, 32
        %s329 = scalar_lea.vmem [#allocation13], %s328
        %s330 = smul.u32 4, %s30
        %s331 = smul.u32 4, %s29
        %s332 = smul.u32 4, %s29
        %p334 = scmp.eq.s32.totalorder %s30, 0
        // Predicated region
        $region57: #{tpu_custom_call.1} parent=39 // pred_check
          %p335 = pneg %p334
        $region58: #{tpu_custom_call.1} parent=39 // pred_check_branch
          %337 = sbr.rel (%p335) target = $region60
        $region59: #{tpu_custom_call.1} parent=39 // pred_region
          %338 = vst [vmem:[#allocation2] sm:$0xff] 0.0
          %339 = vst [vmem:[#allocation2 + $0x8] sm:$0xff] 0.0
          %340 = vst [vmem:[#allocation2 + $0x10] sm:$0xff] 0.0
          %341 = vst [vmem:[#allocation2 + $0x18] sm:$0xff] 0.0
          %342 = vst [vmem:[#allocation3] sm:$0xff] 0.0
          %343 = vst [vmem:[#allocation3 + $0x8] sm:$0xff] 0.0
          %344 = vst [vmem:[#allocation3 + $0x10] sm:$0xff] 0.0
          %345 = vst [vmem:[#allocation3 + $0x18] sm:$0xff] 0.0
        $region60: #{tpu_custom_call.1} parent=39 // pred_fallthru
          _
        %v346 = vld [vmem:[%s291] sm:$0xff]
        %v347 = vld [vmem:[%s291 + $0x8] sm:$0xff]
        %v348 = vld [vmem:[%s291 + $0x10] sm:$0xff]
        %v349 = vld [vmem:[%s291 + $0x18] sm:$0xff]
        %v350 = vld [vmem:[#allocation8] sm:$0xff]
        %v351 = vld [vmem:[#allocation8 + $0x8] sm:$0xff]
        %v352 = vld [vmem:[#allocation8 + $0x10] sm:$0xff]
        %v353 = vld [vmem:[#allocation8 + $0x18] sm:$0xff]
        %v354 = vld [vmem:[#allocation8 + $0x20] sm:$0xff]
        %v355 = vld [vmem:[#allocation8 + $0x28] sm:$0xff]
        %v356 = vld [vmem:[#allocation8 + $0x30] sm:$0xff]
        %v357 = vld [vmem:[#allocation8 + $0x38] sm:$0xff]
        %v358 = vld [vmem:[#allocation8 + $0x40] sm:$0xff]
        %v359 = vld [vmem:[#allocation8 + $0x48] sm:$0xff]
        %v360 = vld [vmem:[#allocation8 + $0x50] sm:$0xff]
        %v361 = vld [vmem:[#allocation8 + $0x58] sm:$0xff]
        %v362 = vld [vmem:[#allocation8 + $0x60] sm:$0xff]
        %v363 = vld [vmem:[#allocation8 + $0x68] sm:$0xff]
        %v364 = vld [vmem:[#allocation8 + $0x70] sm:$0xff]
        %v365 = vld [vmem:[#allocation8 + $0x78] sm:$0xff]
        %s366 = scalar_lea.vmem %s291, 32 [#allocation5]
        %v367 = vld [vmem:[%s366] sm:$0xff]
        %v368 = vld [vmem:[%s366 + $0x8] sm:$0xff]
        %v369 = vld [vmem:[%s366 + $0x10] sm:$0xff]
        %v370 = vld [vmem:[%s366 + $0x18] sm:$0xff]
        %s371 = scalar_lea.vmem [#allocation8], 128
        %v372 = vld [vmem:[%s371] sm:$0xff]
        %v373 = vld [vmem:[%s371 + $0x8] sm:$0xff]
        %v374 = vld [vmem:[%s371 + $0x10] sm:$0xff]
        %v375 = vld [vmem:[%s371 + $0x18] sm:$0xff]
        %v376 = vld [vmem:[%s371 + $0x20] sm:$0xff]
        %v377 = vld [vmem:[%s371 + $0x28] sm:$0xff]
        %v378 = vld [vmem:[%s371 + $0x30] sm:$0xff]
        %v379 = vld [vmem:[%s371 + $0x38] sm:$0xff]
        %v380 = vld [vmem:[%s371 + $0x40] sm:$0xff]
        %v381 = vld [vmem:[%s371 + $0x48] sm:$0xff]
        %v382 = vld [vmem:[%s371 + $0x50] sm:$0xff]
        %v383 = vld [vmem:[%s371 + $0x58] sm:$0xff]
        %v384 = vld [vmem:[%s371 + $0x60] sm:$0xff]
        %v385 = vld [vmem:[%s371 + $0x68] sm:$0xff]
        %v386 = vld [vmem:[%s371 + $0x70] sm:$0xff]
        %v387 = vld [vmem:[%s371 + $0x78] sm:$0xff]
        %388 = vmatprep.subr.mxu0 0.0
        %389 = vmatpush1.msra.mxu0 %v387
        %390 = vmatprep.subr.mxu0 0.0
        %391 = vmatpush1.msra.mxu0 %v386
        %392 = vmatprep.subr.mxu0 0.0
        %393 = vmatpush1.msra.mxu0 %v385
        %394 = vmatprep.subr.mxu0 0.0
        %395 = vmatpush1.msra.mxu0 %v384
        %396 = vmatprep.subr.mxu0 0.0
        %397 = vmatpush1.msra.mxu0 %v383
        %398 = vmatprep.subr.mxu0 0.0
        %399 = vmatpush1.msra.mxu0 %v382
        %400 = vmatprep.subr.mxu0 0.0
        %401 = vmatpush1.msra.mxu0 %v381
        %402 = vmatprep.subr.mxu0 0.0
        %403 = vmatpush1.msra.mxu0 %v380
        %404 = vmatprep.subr.mxu0 0.0
        %405 = vmatpush1.msra.mxu0 %v379
        %406 = vmatprep.subr.mxu0 0.0
        %407 = vmatpush1.msra.mxu0 %v378
        %408 = vmatprep.subr.mxu0 0.0
        %409 = vmatpush1.msra.mxu0 %v377
        %410 = vmatprep.subr.mxu0 0.0
        %411 = vmatpush1.msra.mxu0 %v376
        %412 = vmatprep.subr.mxu0 0.0
        %413 = vmatpush1.msra.mxu0 %v375
        %414 = vmatprep.subr.mxu0 0.0
        %415 = vmatpush1.msra.mxu0 %v374
        %416 = vmatprep.subr.mxu0 0.0
        %417 = vmatpush1.msra.mxu0 %v373
        %418 = vmatprep.subr.mxu0 0.0
        %419 = vmatpush1.msra.mxu0 %v372
        %420 = vmatprep.subr.mxu0 0.0
        %421 = vmatpush2.msra.mxu0 0.0
        %422 = vmatprep.subr.mxu0 0.0
        %423 = vmatpush2.msra.mxu0 0.0
        %424 = vmatprep.subr.mxu0 0.0
        %425 = vmatpush2.msra.mxu0 0.0
        %426 = vmatprep.subr.mxu0 0.0
        %427 = vmatpush2.msra.mxu0 0.0
        %428 = vmatprep.subr.mxu0 0.0
        %429 = vmatpush2.msra.mxu0 0.0
        %430 = vmatprep.subr.mxu0 0.0
        %431 = vmatpush2.msra.mxu0 0.0
        %432 = vmatprep.subr.mxu0 0.0
        %433 = vmatpush2.msra.mxu0 0.0
        %434 = vmatprep.subr.mxu0 0.0
        %435 = vmatpush2.msra.mxu0 0.0
        %436 = vmatprep.subr.mxu0 0.0
        %437 = vmatpush2.msra.mxu0 0.0
        %438 = vmatprep.subr.mxu0 0.0
        %439 = vmatpush2.msra.mxu0 0.0
        %440 = vmatprep.subr.mxu0 0.0
        %441 = vmatpush2.msra.mxu0 0.0
        %442 = vmatprep.subr.mxu0 0.0
        %443 = vmatpush2.msra.mxu0 0.0
        %444 = vmatprep.subr.mxu0 0.0
        %445 = vmatpush2.msra.mxu0 0.0
        %446 = vmatprep.subr.mxu0 0.0
        %447 = vmatpush2.msra.mxu0 0.0
        %448 = vmatprep.subr.mxu0 0.0
        %449 = vmatpush2.msra.mxu0 0.0
        %450 = vmatprep.subr.mxu0 0.0
        %451 = vmatpush2.msra.mxu0 0.0
        %452 = vmatprep.mubr.f32.mxu0 0.0
        %453 = vmatmul.mubr.f32.gmra.mxu0 %v367
        %v454 = vpop.f32.mrf.mxu0
        %v455 = vadd.f32 0.0, %v454
        %v456 = vpop.f32.mrf.mxu0
        %457 = vmatprep.mubr.f32.mxu0 0.0
        %458 = vmatmul.mubr.f32.gmra.mxu0 %v368
        %v459 = vpop.f32.mrf.mxu0
        %v460 = vadd.f32 0.0, %v459
        %v461 = vpop.f32.mrf.mxu0
        %462 = vmatprep.mubr.f32.mxu0 0.0
        %463 = vmatmul.mubr.f32.gmra.mxu0 %v369
        %v464 = vpop.f32.mrf.mxu0
        %v465 = vadd.f32 0.0, %v464
        %v466 = vpop.f32.mrf.mxu0
        %467 = vmatprep.mubr.f32.mxu0 0.0
        %468 = vmatmul.mubr.f32.gmra.mxu0 %v370
        %v469 = vpop.f32.mrf.mxu0
        %v470 = vadd.f32 0.0, %v469
        %v471 = vpop.f32.mrf.mxu0
        %472 = vdwg.mxu0
        %473 = vmatprep.subr.mxu0 0.0
        %474 = vmatpush1.msra.mxu0 %v365
        %475 = vmatprep.subr.mxu0 0.0
        %476 = vmatpush1.msra.mxu0 %v364
        %477 = vmatprep.subr.mxu0 0.0
        %478 = vmatpush1.msra.mxu0 %v363
        %479 = vmatprep.subr.mxu0 0.0
        %480 = vmatpush1.msra.mxu0 %v362
        %481 = vmatprep.subr.mxu0 0.0
        %482 = vmatpush1.msra.mxu0 %v361
        %483 = vmatprep.subr.mxu0 0.0
        %484 = vmatpush1.msra.mxu0 %v360
        %485 = vmatprep.subr.mxu0 0.0
        %486 = vmatpush1.msra.mxu0 %v359
        %487 = vmatprep.subr.mxu0 0.0
        %488 = vmatpush1.msra.mxu0 %v358
        %489 = vmatprep.subr.mxu0 0.0
        %490 = vmatpush1.msra.mxu0 %v357
        %491 = vmatprep.subr.mxu0 0.0
        %492 = vmatpush1.msra.mxu0 %v356
        %493 = vmatprep.subr.mxu0 0.0
        %494 = vmatpush1.msra.mxu0 %v355
        %495 = vmatprep.subr.mxu0 0.0
        %496 = vmatpush1.msra.mxu0 %v354
        %497 = vmatprep.subr.mxu0 0.0
        %498 = vmatpush1.msra.mxu0 %v353
        %499 = vmatprep.subr.mxu0 0.0
        %500 = vmatpush1.msra.mxu0 %v352
        %501 = vmatprep.subr.mxu0 0.0
        %502 = vmatpush1.msra.mxu0 %v351
        %503 = vmatprep.subr.mxu0 0.0
        %504 = vmatpush1.msra.mxu0 %v350
        %505 = vmatprep.subr.mxu0 0.0
        %506 = vmatpush2.msra.mxu0 0.0
        %507 = vmatprep.subr.mxu0 0.0
        %508 = vmatpush2.msra.mxu0 0.0
        %509 = vmatprep.subr.mxu0 0.0
        %510 = vmatpush2.msra.mxu0 0.0
        %511 = vmatprep.subr.mxu0 0.0
        %512 = vmatpush2.msra.mxu0 0.0
        %513 = vmatprep.subr.mxu0 0.0
        %514 = vmatpush2.msra.mxu0 0.0
        %515 = vmatprep.subr.mxu0 0.0
        %516 = vmatpush2.msra.mxu0 0.0
        %517 = vmatprep.subr.mxu0 0.0
        %518 = vmatpush2.msra.mxu0 0.0
        %519 = vmatprep.subr.mxu0 0.0
        %520 = vmatpush2.msra.mxu0 0.0
        %521 = vmatprep.subr.mxu0 0.0
        %522 = vmatpush2.msra.mxu0 0.0
        %523 = vmatprep.subr.mxu0 0.0
        %524 = vmatpush2.msra.mxu0 0.0
        %525 = vmatprep.subr.mxu0 0.0
        %526 = vmatpush2.msra.mxu0 0.0
        %527 = vmatprep.subr.mxu0 0.0
        %528 = vmatpush2.msra.mxu0 0.0
        %529 = vmatprep.subr.mxu0 0.0
        %530 = vmatpush2.msra.mxu0 0.0
        %531 = vmatprep.subr.mxu0 0.0
        %532 = vmatpush2.msra.mxu0 0.0
        %533 = vmatprep.subr.mxu0 0.0
        %534 = vmatpush2.msra.mxu0 0.0
        %535 = vmatprep.subr.mxu0 0.0
        %536 = vmatpush2.msra.mxu0 0.0
        %537 = vmatprep.mubr.f32.mxu0 0.0
        %538 = vmatmul.mubr.f32.gmra.mxu0 %v346
        %v539 = vpop.f32.mrf.mxu0
        %v540 = vadd.f32 %v455, %v539
        %v541 = vpop.f32.mrf.mxu0
        %542 = vmatprep.mubr.f32.mxu0 0.0
        %543 = vmatmul.mubr.f32.gmra.mxu0 %v347
        %v544 = vpop.f32.mrf.mxu0
        %v545 = vadd.f32 %v460, %v544
        %v546 = vpop.f32.mrf.mxu0
        %547 = vmatprep.mubr.f32.mxu0 0.0
        %548 = vmatmul.mubr.f32.gmra.mxu0 %v348
        %v549 = vpop.f32.mrf.mxu0
        %v550 = vadd.f32 %v465, %v549
        %v551 = vpop.f32.mrf.mxu0
        %552 = vmatprep.mubr.f32.mxu0 0.0
        %553 = vmatmul.mubr.f32.gmra.mxu0 %v349
        %v554 = vpop.f32.mrf.mxu0
        %v555 = vadd.f32 %v470, %v554
        %v556 = vpop.f32.mrf.mxu0
        %557 = vdwg.mxu0
        %s558 = scalar_lea.vmem %s291, 64 [#allocation5]
        %v559 = vld [vmem:[%s558] sm:$0xff]
        %v560 = vld [vmem:[%s558 + $0x8] sm:$0xff]
        %v561 = vld [vmem:[%s558 + $0x10] sm:$0xff]
        %v562 = vld [vmem:[%s558 + $0x18] sm:$0xff]
        %s563 = scalar_lea.vmem [#allocation8], 256
        %v564 = vld [vmem:[%s563] sm:$0xff]
        %v565 = vld [vmem:[%s563 + $0x8] sm:$0xff]
        %v566 = vld [vmem:[%s563 + $0x10] sm:$0xff]
        %v567 = vld [vmem:[%s563 + $0x18] sm:$0xff]
        %v568 = vld [vmem:[%s563 + $0x20] sm:$0xff]
        %v569 = vld [vmem:[%s563 + $0x28] sm:$0xff]
        %v570 = vld [vmem:[%s563 + $0x30] sm:$0xff]
        %v571 = vld [vmem:[%s563 + $0x38] sm:$0xff]
        %v572 = vld [vmem:[%s563 + $0x40] sm:$0xff]
        %v573 = vld [vmem:[%s563 + $0x48] sm:$0xff]
        %v574 = vld [vmem:[%s563 + $0x50] sm:$0xff]
        %v575 = vld [vmem:[%s563 + $0x58] sm:$0xff]
        %v576 = vld [vmem:[%s563 + $0x60] sm:$0xff]
        %v577 = vld [vmem:[%s563 + $0x68] sm:$0xff]
        %v578 = vld [vmem:[%s563 + $0x70] sm:$0xff]
        %v579 = vld [vmem:[%s563 + $0x78] sm:$0xff]
        %580 = vmatprep.subr.mxu0 0.0
        %581 = vmatpush1.msra.mxu0 %v579
        %582 = vmatprep.subr.mxu0 0.0
        %583 = vmatpush1.msra.mxu0 %v578
        %584 = vmatprep.subr.mxu0 0.0
        %585 = vmatpush1.msra.mxu0 %v577
        %586 = vmatprep.subr.mxu0 0.0
        %587 = vmatpush1.msra.mxu0 %v576
        %588 = vmatprep.subr.mxu0 0.0
        %589 = vmatpush1.msra.mxu0 %v575
        %590 = vmatprep.subr.mxu0 0.0
        %591 = vmatpush1.msra.mxu0 %v574
        %592 = vmatprep.subr.mxu0 0.0
        %593 = vmatpush1.msra.mxu0 %v573
        %594 = vmatprep.subr.mxu0 0.0
        %595 = vmatpush1.msra.mxu0 %v572
        %596 = vmatprep.subr.mxu0 0.0
        %597 = vmatpush1.msra.mxu0 %v571
        %598 = vmatprep.subr.mxu0 0.0
        %599 = vmatpush1.msra.mxu0 %v570
        %600 = vmatprep.subr.mxu0 0.0
        %601 = vmatpush1.msra.mxu0 %v569
        %602 = vmatprep.subr.mxu0 0.0
        %603 = vmatpush1.msra.mxu0 %v568
        %604 = vmatprep.subr.mxu0 0.0
        %605 = vmatpush1.msra.mxu0 %v567
        %606 = vmatprep.subr.mxu0 0.0
        %607 = vmatpush1.msra.mxu0 %v566
        %608 = vmatprep.subr.mxu0 0.0
        %609 = vmatpush1.msra.mxu0 %v565
        %610 = vmatprep.subr.mxu0 0.0
        %611 = vmatpush1.msra.mxu0 %v564
        %612 = vmatprep.subr.mxu0 0.0
        %613 = vmatpush2.msra.mxu0 0.0
        %614 = vmatprep.subr.mxu0 0.0
        %615 = vmatpush2.msra.mxu0 0.0
        %616 = vmatprep.subr.mxu0 0.0
        %617 = vmatpush2.msra.mxu0 0.0
        %618 = vmatprep.subr.mxu0 0.0
        %619 = vmatpush2.msra.mxu0 0.0
        %620 = vmatprep.subr.mxu0 0.0
        %621 = vmatpush2.msra.mxu0 0.0
        %622 = vmatprep.subr.mxu0 0.0
        %623 = vmatpush2.msra.mxu0 0.0
        %624 = vmatprep.subr.mxu0 0.0
        %625 = vmatpush2.msra.mxu0 0.0
        %626 = vmatprep.subr.mxu0 0.0
        %627 = vmatpush2.msra.mxu0 0.0
        %628 = vmatprep.subr.mxu0 0.0
        %629 = vmatpush2.msra.mxu0 0.0
        %630 = vmatprep.subr.mxu0 0.0
        %631 = vmatpush2.msra.mxu0 0.0
        %632 = vmatprep.subr.mxu0 0.0
        %633 = vmatpush2.msra.mxu0 0.0
        %634 = vmatprep.subr.mxu0 0.0
        %635 = vmatpush2.msra.mxu0 0.0
        %636 = vmatprep.subr.mxu0 0.0
        %637 = vmatpush2.msra.mxu0 0.0
        %638 = vmatprep.subr.mxu0 0.0
        %639 = vmatpush2.msra.mxu0 0.0
        %640 = vmatprep.subr.mxu0 0.0
        %641 = vmatpush2.msra.mxu0 0.0
        %642 = vmatprep.subr.mxu0 0.0
        %643 = vmatpush2.msra.mxu0 0.0
        %644 = vmatprep.mubr.f32.mxu0 0.0
        %645 = vmatmul.mubr.f32.gmra.mxu0 %v559
        %v646 = vpop.f32.mrf.mxu0
        %v647 = vadd.f32 0.0, %v646
        %v648 = vpop.f32.mrf.mxu0
        %649 = vmatprep.mubr.f32.mxu0 0.0
        %650 = vmatmul.mubr.f32.gmra.mxu0 %v560
        %v651 = vpop.f32.mrf.mxu0
        %v652 = vadd.f32 0.0, %v651
        %v653 = vpop.f32.mrf.mxu0
        %654 = vmatprep.mubr.f32.mxu0 0.0
        %655 = vmatmul.mubr.f32.gmra.mxu0 %v561
        %v656 = vpop.f32.mrf.mxu0
        %v657 = vadd.f32 0.0, %v656
        %v658 = vpop.f32.mrf.mxu0
        %659 = vmatprep.mubr.f32.mxu0 0.0
        %660 = vmatmul.mubr.f32.gmra.mxu0 %v562
        %v661 = vpop.f32.mrf.mxu0
        %v662 = vadd.f32 0.0, %v661
        %v663 = vpop.f32.mrf.mxu0
        %664 = vdwg.mxu0
        %v665 = vadd.f32 %v540, %v647
        %v666 = vadd.f32 %v545, %v652
        %v667 = vadd.f32 %v550, %v657
        %v668 = vadd.f32 %v555, %v662
        %s669 = scalar_lea.vmem %s291, 96 [#allocation5]
        %v670 = vld [vmem:[%s669] sm:$0xff]
        %v671 = vld [vmem:[%s669 + $0x8] sm:$0xff]
        %v672 = vld [vmem:[%s669 + $0x10] sm:$0xff]
        %v673 = vld [vmem:[%s669 + $0x18] sm:$0xff]
        %s674 = scalar_lea.vmem [#allocation8], 384
        %v675 = vld [vmem:[%s674] sm:$0xff]
        %v676 = vld [vmem:[%s674 + $0x8] sm:$0xff]
        %v677 = vld [vmem:[%s674 + $0x10] sm:$0xff]
        %v678 = vld [vmem:[%s674 + $0x18] sm:$0xff]
        %v679 = vld [vmem:[%s674 + $0x20] sm:$0xff]
        %v680 = vld [vmem:[%s674 + $0x28] sm:$0xff]
        %v681 = vld [vmem:[%s674 + $0x30] sm:$0xff]
        %v682 = vld [vmem:[%s674 + $0x38] sm:$0xff]
        %v683 = vld [vmem:[%s674 + $0x40] sm:$0xff]
        %v684 = vld [vmem:[%s674 + $0x48] sm:$0xff]
        %v685 = vld [vmem:[%s674 + $0x50] sm:$0xff]
        %v686 = vld [vmem:[%s674 + $0x58] sm:$0xff]
        %v687 = vld [vmem:[%s674 + $0x60] sm:$0xff]
        %v688 = vld [vmem:[%s674 + $0x68] sm:$0xff]
        %v689 = vld [vmem:[%s674 + $0x70] sm:$0xff]
        %v690 = vld [vmem:[%s674 + $0x78] sm:$0xff]
        %691 = vmatprep.subr.mxu0 0.0
        %692 = vmatpush1.msra.mxu0 %v690
        %693 = vmatprep.subr.mxu0 0.0
        %694 = vmatpush1.msra.mxu0 %v689
        %695 = vmatprep.subr.mxu0 0.0
        %696 = vmatpush1.msra.mxu0 %v688
        %697 = vmatprep.subr.mxu0 0.0
        %698 = vmatpush1.msra.mxu0 %v687
        %699 = vmatprep.subr.mxu0 0.0
        %700 = vmatpush1.msra.mxu0 %v686
        %701 = vmatprep.subr.mxu0 0.0
        %702 = vmatpush1.msra.mxu0 %v685
        %703 = vmatprep.subr.mxu0 0.0
        %704 = vmatpush1.msra.mxu0 %v684
        %705 = vmatprep.subr.mxu0 0.0
        %706 = vmatpush1.msra.mxu0 %v683
        %707 = vmatprep.subr.mxu0 0.0
        %708 = vmatpush1.msra.mxu0 %v682
        %709 = vmatprep.subr.mxu0 0.0
        %710 = vmatpush1.msra.mxu0 %v681
        %711 = vmatprep.subr.mxu0 0.0
        %712 = vmatpush1.msra.mxu0 %v680
        %713 = vmatprep.subr.mxu0 0.0
        %714 = vmatpush1.msra.mxu0 %v679
        %715 = vmatprep.subr.mxu0 0.0
        %716 = vmatpush1.msra.mxu0 %v678
        %717 = vmatprep.subr.mxu0 0.0
        %718 = vmatpush1.msra.mxu0 %v677
        %719 = vmatprep.subr.mxu0 0.0
        %720 = vmatpush1.msra.mxu0 %v676
        %721 = vmatprep.subr.mxu0 0.0
        %722 = vmatpush1.msra.mxu0 %v675
        %723 = vmatprep.subr.mxu0 0.0
        %724 = vmatpush2.msra.mxu0 0.0
        %725 = vmatprep.subr.mxu0 0.0
        %726 = vmatpush2.msra.mxu0 0.0
        %727 = vmatprep.subr.mxu0 0.0
        %728 = vmatpush2.msra.mxu0 0.0
        %729 = vmatprep.subr.mxu0 0.0
        %730 = vmatpush2.msra.mxu0 0.0
        %731 = vmatprep.subr.mxu0 0.0
        %732 = vmatpush2.msra.mxu0 0.0
        %733 = vmatprep.subr.mxu0 0.0
        %734 = vmatpush2.msra.mxu0 0.0
        %735 = vmatprep.subr.mxu0 0.0
        %736 = vmatpush2.msra.mxu0 0.0
        %737 = vmatprep.subr.mxu0 0.0
        %738 = vmatpush2.msra.mxu0 0.0
        %739 = vmatprep.subr.mxu0 0.0
        %740 = vmatpush2.msra.mxu0 0.0
        %741 = vmatprep.subr.mxu0 0.0
        %742 = vmatpush2.msra.mxu0 0.0
        %743 = vmatprep.subr.mxu0 0.0
        %744 = vmatpush2.msra.mxu0 0.0
        %745 = vmatprep.subr.mxu0 0.0
        %746 = vmatpush2.msra.mxu0 0.0
        %747 = vmatprep.subr.mxu0 0.0
        %748 = vmatpush2.msra.mxu0 0.0
        %749 = vmatprep.subr.mxu0 0.0
        %750 = vmatpush2.msra.mxu0 0.0
        %751 = vmatprep.subr.mxu0 0.0
        %752 = vmatpush2.msra.mxu0 0.0
        %753 = vmatprep.subr.mxu0 0.0
        %754 = vmatpush2.msra.mxu0 0.0
        %755 = vmatprep.mubr.f32.mxu0 0.0
        %756 = vmatmul.mubr.f32.gmra.mxu0 %v670
        %v757 = vpop.f32.mrf.mxu0
        %v758 = vadd.f32 0.0, %v757
        %v759 = vpop.f32.mrf.mxu0
        %760 = vmatprep.mubr.f32.mxu0 0.0
        %761 = vmatmul.mubr.f32.gmra.mxu0 %v671
        %v762 = vpop.f32.mrf.mxu0
        %v763 = vadd.f32 0.0, %v762
        %v764 = vpop.f32.mrf.mxu0
        %765 = vmatprep.mubr.f32.mxu0 0.0
        %766 = vmatmul.mubr.f32.gmra.mxu0 %v672
        %v767 = vpop.f32.mrf.mxu0
        %v768 = vadd.f32 0.0, %v767
        %v769 = vpop.f32.mrf.mxu0
        %770 = vmatprep.mubr.f32.mxu0 0.0
        %771 = vmatmul.mubr.f32.gmra.mxu0 %v673
        %v772 = vpop.f32.mrf.mxu0
        %v773 = vadd.f32 0.0, %v772
        %v774 = vpop.f32.mrf.mxu0
        %775 = vdwg.mxu0
        %v776 = vadd.f32 %v665, %v758
        %v777 = vadd.f32 %v666, %v763
        %v778 = vadd.f32 %v667, %v768
        %v779 = vadd.f32 %v668, %v773
        %s780 = sld [smem:[#allocation4]]
        %v781 = vstv %s780
        %v782 = vadd.f32 %v776, %v781
        %v783 = vadd.f32 %v777, %v781
        %v784 = vadd.f32 %v778, %v781
        %v785 = vadd.f32 %v779, %v781
        %v786 = vmul.f32 %v782, 0.5
        %v787 = vmul.f32 %v783, 0.5
        %v788 = vmul.f32 %v784, 0.5
        %v789 = vmul.f32 %v785, 0.5
        %v790 = vtanh.pop %v786
        %v791 = vtanh.pop %v787
        %v792 = vtanh.pop %v788
        %v793 = vtanh.pop %v789
        %v794 = vmul.f32 %v790, 0.5
        %v795 = vmul.f32 %v791, 0.5
        %v796 = vmul.f32 %v792, 0.5
        %v797 = vmul.f32 %v793, 0.5
        %v798 = vadd.f32 %v794, 0.5
        %v799 = vadd.f32 %v795, 0.5
        %v800 = vadd.f32 %v796, 0.5
        %v801 = vadd.f32 %v797, 0.5
        %v802 = vmul.f32 %v798, 1.442695
        %v803 = vpow.pop %v802
        %v804 = vmul.f32 %v799, 1.442695
        %v805 = vpow.pop %v804
        %v806 = vmul.f32 %v800, 1.442695
        %v807 = vpow.pop %v806
        %v808 = vmul.f32 %v801, 1.442695
        %v809 = vpow.pop %v808
        %v810 = vpack.c.bf16 %v805, %v803
        %v811 = vpack.c.bf16 %v809, %v807
        %v812 = vld [vmem:[#allocation3] sm:$0xff]
        %v813 = vld [vmem:[#allocation3 + $0x8] sm:$0xff]
        %v814 = vld [vmem:[#allocation3 + $0x10] sm:$0xff]
        %v815 = vld [vmem:[#allocation3 + $0x18] sm:$0xff]
        %v816 = vunpack.c.l.bf16 %v810
        %v817 = vunpack.c.h.bf16 %v810
        %v818 = vunpack.c.l.bf16 %v811
        %v819 = vunpack.c.h.bf16 %v811
        %v820 = vadd.f32 %v812, %v816
        %v821 = vadd.f32 %v813, %v817
        %v822 = vadd.f32 %v814, %v818
        %v823 = vadd.f32 %v815, %v819
        %824 = vst [vmem:[#allocation3] sm:$0xff] %v820
        %825 = vst [vmem:[#allocation3 + $0x8] sm:$0xff] %v821
        %826 = vst [vmem:[#allocation3 + $0x10] sm:$0xff] %v822
        %827 = vst [vmem:[#allocation3 + $0x18] sm:$0xff] %v823
        %v828 = vld [vmem:[#allocation10] sm:$0xf]
        %v829 = vld [vmem:[#allocation10 + $0x4] sm:$0xf]
        %v830 = vld [vmem:[#allocation10 + $0x8] sm:$0xf]
        %v831 = vld [vmem:[#allocation10 + $0xc] sm:$0xf]
        %v832 = vld [vmem:[#allocation10 + $0x10] sm:$0xf]
        %v833 = vld [vmem:[#allocation10 + $0x14] sm:$0xf]
        %v834 = vld [vmem:[#allocation10 + $0x18] sm:$0xf]
        %v835 = vld [vmem:[#allocation10 + $0x1c] sm:$0xf]
        %v836 = vld [vmem:[#allocation10 + $0x20] sm:$0xf]
        %v837 = vld [vmem:[#allocation10 + $0x24] sm:$0xf]
        %v838 = vld [vmem:[#allocation10 + $0x28] sm:$0xf]
        %v839 = vld [vmem:[#allocation10 + $0x2c] sm:$0xf]
        %v840 = vld [vmem:[#allocation10 + $0x30] sm:$0xf]
        %v841 = vld [vmem:[#allocation10 + $0x34] sm:$0xf]
        %v842 = vld [vmem:[#allocation10 + $0x38] sm:$0xf]
        %v843 = vld [vmem:[#allocation10 + $0x3c] sm:$0xf]
        %v860 = vunpack.c.l.b16 %v828
        %v861 = vunpack.c.l.b16 %v829
        %v862 = vunpack.c.l.b16 %v830
        %v863 = vunpack.c.l.b16 %v831
        %v864 = vunpack.c.l.b16 %v832
        %v865 = vunpack.c.l.b16 %v833
        %v866 = vunpack.c.l.b16 %v834
        %v867 = vunpack.c.l.b16 %v835
        %v868 = vunpack.c.l.b16 %v836
        %v869 = vunpack.c.l.b16 %v837
        %v870 = vunpack.c.l.b16 %v838
        %v871 = vunpack.c.l.b16 %v839
        %v872 = vunpack.c.l.b16 %v840
        %v873 = vunpack.c.l.b16 %v841
        %v874 = vunpack.c.l.b16 %v842
        %v875 = vunpack.c.l.b16 %v843
        %v876 = vpack.c.b16 %v861, %v860
        %v877 = vpack.c.b16 %v863, %v862
        %v878 = vpack.c.b16 %v865, %v864
        %v879 = vpack.c.b16 %v867, %v866
        %v880 = vpack.c.b16 %v869, %v868
        %v881 = vpack.c.b16 %v871, %v870
        %v882 = vpack.c.b16 %v873, %v872
        %v883 = vpack.c.b16 %v875, %v874
        %892 = vmatprep.subr.bf16.mxu0 0
        %893 = vmatpush1.bf16.msra.mxu0 %v883
        %894 = vmatprep.subr.bf16.mxu0 0
        %895 = vmatpush1.bf16.msra.mxu0 %v882
        %896 = vmatprep.subr.bf16.mxu0 0
        %897 = vmatpush1.bf16.msra.mxu0 %v881
        %898 = vmatprep.subr.bf16.mxu0 0
        %899 = vmatpush1.bf16.msra.mxu0 %v880
        %900 = vmatprep.subr.bf16.mxu0 0
        %901 = vmatpush1.bf16.msra.mxu0 %v879
        %902 = vmatprep.subr.bf16.mxu0 0
        %903 = vmatpush1.bf16.msra.mxu0 %v878
        %904 = vmatprep.subr.bf16.mxu0 0
        %905 = vmatpush1.bf16.msra.mxu0 %v877
        %906 = vmatprep.subr.bf16.mxu0 0
        %907 = vmatpush1.bf16.msra.mxu0 %v876
        %908 = vmatprep.subr.bf16.mxu0 0
        %909 = vmatpush2.bf16.msra.mxu0 0
        %910 = vmatprep.subr.bf16.mxu0 0
        %911 = vmatpush2.bf16.msra.mxu0 0
        %912 = vmatprep.subr.bf16.mxu0 0
        %913 = vmatpush2.bf16.msra.mxu0 0
        %914 = vmatprep.subr.bf16.mxu0 0
        %915 = vmatpush2.bf16.msra.mxu0 0
        %916 = vmatprep.subr.bf16.mxu0 0
        %917 = vmatpush2.bf16.msra.mxu0 0
        %918 = vmatprep.subr.bf16.mxu0 0
        %919 = vmatpush2.bf16.msra.mxu0 0
        %920 = vmatprep.subr.bf16.mxu0 0
        %921 = vmatpush2.bf16.msra.mxu0 0
        %922 = vmatprep.subr.bf16.mxu0 0
        %923 = vmatpush2.bf16.msra.mxu0 0
        %924 = vmatprep.mubr.bf16.mxu0 0
        %925 = vmatmul.mubr.bf16.gmra.mxu0 %v810
        %v926 = vpop.f32.mrf.mxu0
        %v927 = vadd.f32 0.0, %v926
        %v928 = vpop.f32.mrf.mxu0
        %v929 = vpop.f32.mrf.mxu0
        %v930 = vadd.f32 0.0, %v929
        %v931 = vpop.f32.mrf.mxu0
        %932 = vmatprep.mubr.bf16.mxu0 0
        %933 = vmatmul.mubr.bf16.gmra.mxu0 %v811
        %v934 = vpop.f32.mrf.mxu0
        %v935 = vadd.f32 0.0, %v934
        %v936 = vpop.f32.mrf.mxu0
        %v937 = vpop.f32.mrf.mxu0
        %v938 = vadd.f32 0.0, %v937
        %v939 = vpop.f32.mrf.mxu0
        %940 = vdwg.mxu0
        %v941 = vld [vmem:[#allocation2] sm:$0xff]
        %v942 = vld [vmem:[#allocation2 + $0x8] sm:$0xff]
        %v943 = vld [vmem:[#allocation2 + $0x10] sm:$0xff]
        %v944 = vld [vmem:[#allocation2 + $0x18] sm:$0xff]
        %v945 = vld [vmem:[%s291] sm:$0xff]
        %v946 = vld [vmem:[%s291 + $0x8] sm:$0xff]
        %v947 = vld [vmem:[%s291 + $0x10] sm:$0xff]
        %v948 = vld [vmem:[%s291 + $0x18] sm:$0xff]
        %v949 = vmul.f32 %v927, %v945
        %v950 = vmul.f32 %v930, %v946
        %v951 = vmul.f32 %v935, %v947
        %v952 = vmul.f32 %v938, %v948
        %v953 = vadd.f32 %v941, %v949
        %v954 = vadd.f32 %v942, %v950
        %v955 = vadd.f32 %v943, %v951
        %v956 = vadd.f32 %v944, %v952
        %957 = vst [vmem:[#allocation2] sm:$0xff] %v953
        %958 = vst [vmem:[#allocation2 + $0x8] sm:$0xff] %v954
        %959 = vst [vmem:[#allocation2 + $0x10] sm:$0xff] %v955
        %960 = vst [vmem:[#allocation2 + $0x18] sm:$0xff] %v956
        %s961 = scalar_lea.vmem [#allocation10], 64
        %v962 = vld [vmem:[%s961] sm:$0xf]
        %v963 = vld [vmem:[%s961 + $0x4] sm:$0xf]
        %v964 = vld [vmem:[%s961 + $0x8] sm:$0xf]
        %v965 = vld [vmem:[%s961 + $0xc] sm:$0xf]
        %v966 = vld [vmem:[%s961 + $0x10] sm:$0xf]
        %v967 = vld [vmem:[%s961 + $0x14] sm:$0xf]
        %v968 = vld [vmem:[%s961 + $0x18] sm:$0xf]
        %v969 = vld [vmem:[%s961 + $0x1c] sm:$0xf]
        %v970 = vld [vmem:[%s961 + $0x20] sm:$0xf]
        %v971 = vld [vmem:[%s961 + $0x24] sm:$0xf]
        %v972 = vld [vmem:[%s961 + $0x28] sm:$0xf]
        %v973 = vld [vmem:[%s961 + $0x2c] sm:$0xf]
        %v974 = vld [vmem:[%s961 + $0x30] sm:$0xf]
        %v975 = vld [vmem:[%s961 + $0x34] sm:$0xf]
        %v976 = vld [vmem:[%s961 + $0x38] sm:$0xf]
        %v977 = vld [vmem:[%s961 + $0x3c] sm:$0xf]
        %v994 = vunpack.c.l.b16 %v962
        %v995 = vunpack.c.l.b16 %v963
        %v996 = vunpack.c.l.b16 %v964
        %v997 = vunpack.c.l.b16 %v965
        %v998 = vunpack.c.l.b16 %v966
        %v999 = vunpack.c.l.b16 %v967
        %v1000 = vunpack.c.l.b16 %v968
        %v1001 = vunpack.c.l.b16 %v969
        %v1002 = vunpack.c.l.b16 %v970
        %v1003 = vunpack.c.l.b16 %v971
        %v1004 = vunpack.c.l.b16 %v972
        %v1005 = vunpack.c.l.b16 %v973
        %v1006 = vunpack.c.l.b16 %v974
        %v1007 = vunpack.c.l.b16 %v975
        %v1008 = vunpack.c.l.b16 %v976
        %v1009 = vunpack.c.l.b16 %v977
        %v1010 = vpack.c.b16 %v995, %v994
        %v1011 = vpack.c.b16 %v997, %v996
        %v1012 = vpack.c.b16 %v999, %v998
        %v1013 = vpack.c.b16 %v1001, %v1000
        %v1014 = vpack.c.b16 %v1003, %v1002
        %v1015 = vpack.c.b16 %v1005, %v1004
        %v1016 = vpack.c.b16 %v1007, %v1006
        %v1017 = vpack.c.b16 %v1009, %v1008
        %1026 = vmatprep.subr.bf16.mxu0 0
        %1027 = vmatpush1.bf16.msra.mxu0 %v1017
        %1028 = vmatprep.subr.bf16.mxu0 0
        %1029 = vmatpush1.bf16.msra.mxu0 %v1016
        %1030 = vmatprep.subr.bf16.mxu0 0
        %1031 = vmatpush1.bf16.msra.mxu0 %v1015
        %1032 = vmatprep.subr.bf16.mxu0 0
        %1033 = vmatpush1.bf16.msra.mxu0 %v1014
        %1034 = vmatprep.subr.bf16.mxu0 0
        %1035 = vmatpush1.bf16.msra.mxu0 %v1013
        %1036 = vmatprep.subr.bf16.mxu0 0
        %1037 = vmatpush1.bf16.msra.mxu0 %v1012
        %1038 = vmatprep.subr.bf16.mxu0 0
        %1039 = vmatpush1.bf16.msra.mxu0 %v1011
        %1040 = vmatprep.subr.bf16.mxu0 0
        %1041 = vmatpush1.bf16.msra.mxu0 %v1010
        %1042 = vmatprep.subr.bf16.mxu0 0
        %1043 = vmatpush2.bf16.msra.mxu0 0
        %1044 = vmatprep.subr.bf16.mxu0 0
        %1045 = vmatpush2.bf16.msra.mxu0 0
        %1046 = vmatprep.subr.bf16.mxu0 0
        %1047 = vmatpush2.bf16.msra.mxu0 0
        %1048 = vmatprep.subr.bf16.mxu0 0
        %1049 = vmatpush2.bf16.msra.mxu0 0
        %1050 = vmatprep.subr.bf16.mxu0 0
        %1051 = vmatpush2.bf16.msra.mxu0 0
        %1052 = vmatprep.subr.bf16.mxu0 0
        %1053 = vmatpush2.bf16.msra.mxu0 0
        %1054 = vmatprep.subr.bf16.mxu0 0
        %1055 = vmatpush2.bf16.msra.mxu0 0
        %1056 = vmatprep.subr.bf16.mxu0 0
        %1057 = vmatpush2.bf16.msra.mxu0 0
        %1058 = vmatprep.mubr.bf16.mxu0 0
        %1059 = vmatmul.mubr.bf16.gmra.mxu0 %v810
        %v1060 = vpop.f32.mrf.mxu0
        %v1061 = vadd.f32 0.0, %v1060
        %v1062 = vpop.f32.mrf.mxu0
        %v1063 = vpop.f32.mrf.mxu0
        %v1064 = vadd.f32 0.0, %v1063
        %v1065 = vpop.f32.mrf.mxu0
        %1066 = vmatprep.mubr.bf16.mxu0 0
        %1067 = vmatmul.mubr.bf16.gmra.mxu0 %v811
        %v1068 = vpop.f32.mrf.mxu0
        %v1069 = vadd.f32 0.0, %v1068
        %v1070 = vpop.f32.mrf.mxu0
        %v1071 = vpop.f32.mrf.mxu0
        %v1072 = vadd.f32 0.0, %v1071
        %v1073 = vpop.f32.mrf.mxu0
        %1074 = vdwg.mxu0
        %v1075 = vld [vmem:[#allocation2] sm:$0xff]
        %v1076 = vld [vmem:[#allocation2 + $0x8] sm:$0xff]
        %v1077 = vld [vmem:[#allocation2 + $0x10] sm:$0xff]
        %v1078 = vld [vmem:[#allocation2 + $0x18] sm:$0xff]
        %v1079 = vld [vmem:[%s366] sm:$0xff]
        %v1080 = vld [vmem:[%s366 + $0x8] sm:$0xff]
        %v1081 = vld [vmem:[%s366 + $0x10] sm:$0xff]
        %v1082 = vld [vmem:[%s366 + $0x18] sm:$0xff]
        %v1083 = vmul.f32 %v1061, %v1079
        %v1084 = vmul.f32 %v1064, %v1080
        %v1085 = vmul.f32 %v1069, %v1081
        %v1086 = vmul.f32 %v1072, %v1082
        %v1087 = vadd.f32 %v1075, %v1083
        %v1088 = vadd.f32 %v1076, %v1084
        %v1089 = vadd.f32 %v1077, %v1085
        %v1090 = vadd.f32 %v1078, %v1086
        %1091 = vst [vmem:[#allocation2] sm:$0xff] %v1087
        %1092 = vst [vmem:[#allocation2 + $0x8] sm:$0xff] %v1088
        %1093 = vst [vmem:[#allocation2 + $0x10] sm:$0xff] %v1089
        %1094 = vst [vmem:[#allocation2 + $0x18] sm:$0xff] %v1090
        %s1095 = scalar_lea.vmem [#allocation10], 128
        %v1096 = vld [vmem:[%s1095] sm:$0xf]
        %v1097 = vld [vmem:[%s1095 + $0x4] sm:$0xf]
        %v1098 = vld [vmem:[%s1095 + $0x8] sm:$0xf]
        %v1099 = vld [vmem:[%s1095 + $0xc] sm:$0xf]
        %v1100 = vld [vmem:[%s1095 + $0x10] sm:$0xf]
        %v1101 = vld [vmem:[%s1095 + $0x14] sm:$0xf]
        %v1102 = vld [vmem:[%s1095 + $0x18] sm:$0xf]
        %v1103 = vld [vmem:[%s1095 + $0x1c] sm:$0xf]
        %v1104 = vld [vmem:[%s1095 + $0x20] sm:$0xf]
        %v1105 = vld [vmem:[%s1095 + $0x24] sm:$0xf]
        %v1106 = vld [vmem:[%s1095 + $0x28] sm:$0xf]
        %v1107 = vld [vmem:[%s1095 + $0x2c] sm:$0xf]
        %v1108 = vld [vmem:[%s1095 + $0x30] sm:$0xf]
        %v1109 = vld [vmem:[%s1095 + $0x34] sm:$0xf]
        %v1110 = vld [vmem:[%s1095 + $0x38] sm:$0xf]
        %v1111 = vld [vmem:[%s1095 + $0x3c] sm:$0xf]
        %v1128 = vunpack.c.l.b16 %v1096
        %v1129 = vunpack.c.l.b16 %v1097
        %v1130 = vunpack.c.l.b16 %v1098
        %v1131 = vunpack.c.l.b16 %v1099
        %v1132 = vunpack.c.l.b16 %v1100
        %v1133 = vunpack.c.l.b16 %v1101
        %v1134 = vunpack.c.l.b16 %v1102
        %v1135 = vunpack.c.l.b16 %v1103
        %v1136 = vunpack.c.l.b16 %v1104
        %v1137 = vunpack.c.l.b16 %v1105
        %v1138 = vunpack.c.l.b16 %v1106
        %v1139 = vunpack.c.l.b16 %v1107
        %v1140 = vunpack.c.l.b16 %v1108
        %v1141 = vunpack.c.l.b16 %v1109
        %v1142 = vunpack.c.l.b16 %v1110
        %v1143 = vunpack.c.l.b16 %v1111
        %v1144 = vpack.c.b16 %v1129, %v1128
        %v1145 = vpack.c.b16 %v1131, %v1130
        %v1146 = vpack.c.b16 %v1133, %v1132
        %v1147 = vpack.c.b16 %v1135, %v1134
        %v1148 = vpack.c.b16 %v1137, %v1136
        %v1149 = vpack.c.b16 %v1139, %v1138
        %v1150 = vpack.c.b16 %v1141, %v1140
        %v1151 = vpack.c.b16 %v1143, %v1142
        %1160 = vmatprep.subr.bf16.mxu0 0
        %1161 = vmatpush1.bf16.msra.mxu0 %v1151
        %1162 = vmatprep.subr.bf16.mxu0 0
        %1163 = vmatpush1.bf16.msra.mxu0 %v1150
        %1164 = vmatprep.subr.bf16.mxu0 0
        %1165 = vmatpush1.bf16.msra.mxu0 %v1149
        %1166 = vmatprep.subr.bf16.mxu0 0
        %1167 = vmatpush1.bf16.msra.mxu0 %v1148
        %1168 = vmatprep.subr.bf16.mxu0 0
        %1169 = vmatpush1.bf16.msra.mxu0 %v1147
        %1170 = vmatprep.subr.bf16.mxu0 0
        %1171 = vmatpush1.bf16.msra.mxu0 %v1146
        %1172 = vmatprep.subr.bf16.mxu0 0
        %1173 = vmatpush1.bf16.msra.mxu0 %v1145
        %1174 = vmatprep.subr.bf16.mxu0 0
        %1175 = vmatpush1.bf16.msra.mxu0 %v1144
        %1176 = vmatprep.subr.bf16.mxu0 0
        %1177 = vmatpush2.bf16.msra.mxu0 0
        %1178 = vmatprep.subr.bf16.mxu0 0
        %1179 = vmatpush2.bf16.msra.mxu0 0
        %1180 = vmatprep.subr.bf16.mxu0 0
        %1181 = vmatpush2.bf16.msra.mxu0 0
        %1182 = vmatprep.subr.bf16.mxu0 0
        %1183 = vmatpush2.bf16.msra.mxu0 0
        %1184 = vmatprep.subr.bf16.mxu0 0
        %1185 = vmatpush2.bf16.msra.mxu0 0
        %1186 = vmatprep.subr.bf16.mxu0 0
        %1187 = vmatpush2.bf16.msra.mxu0 0
        %1188 = vmatprep.subr.bf16.mxu0 0
        %1189 = vmatpush2.bf16.msra.mxu0 0
        %1190 = vmatprep.subr.bf16.mxu0 0
        %1191 = vmatpush2.bf16.msra.mxu0 0
        %1192 = vmatprep.mubr.bf16.mxu0 0
        %1193 = vmatmul.mubr.bf16.gmra.mxu0 %v810
        %v1194 = vpop.f32.mrf.mxu0
        %v1195 = vadd.f32 0.0, %v1194
        %v1196 = vpop.f32.mrf.mxu0
        %v1197 = vpop.f32.mrf.mxu0
        %v1198 = vadd.f32 0.0, %v1197
        %v1199 = vpop.f32.mrf.mxu0
        %1200 = vmatprep.mubr.bf16.mxu0 0
        %1201 = vmatmul.mubr.bf16.gmra.mxu0 %v811
        %v1202 = vpop.f32.mrf.mxu0
        %v1203 = vadd.f32 0.0, %v1202
        %v1204 = vpop.f32.mrf.mxu0
        %v1205 = vpop.f32.mrf.mxu0
        %v1206 = vadd.f32 0.0, %v1205
        %v1207 = vpop.f32.mrf.mxu0
        %1208 = vdwg.mxu0
        %v1209 = vld [vmem:[#allocation2] sm:$0xff]
        %v1210 = vld [vmem:[#allocation2 + $0x8] sm:$0xff]
        %v1211 = vld [vmem:[#allocation2 + $0x10] sm:$0xff]
        %v1212 = vld [vmem:[#allocation2 + $0x18] sm:$0xff]
        %v1213 = vld [vmem:[%s558] sm:$0xff]
        %v1214 = vld [vmem:[%s558 + $0x8] sm:$0xff]
        %v1215 = vld [vmem:[%s558 + $0x10] sm:$0xff]
        %v1216 = vld [vmem:[%s558 + $0x18] sm:$0xff]
        %v1217 = vmul.f32 %v1195, %v1213
        %v1218 = vmul.f32 %v1198, %v1214
        %v1219 = vmul.f32 %v1203, %v1215
        %v1220 = vmul.f32 %v1206, %v1216
        %v1221 = vadd.f32 %v1209, %v1217
        %v1222 = vadd.f32 %v1210, %v1218
        %v1223 = vadd.f32 %v1211, %v1219
        %v1224 = vadd.f32 %v1212, %v1220
        %1225 = vst [vmem:[#allocation2] sm:$0xff] %v1221
        %1226 = vst [vmem:[#allocation2 + $0x8] sm:$0xff] %v1222
        %1227 = vst [vmem:[#allocation2 + $0x10] sm:$0xff] %v1223
        %1228 = vst [vmem:[#allocation2 + $0x18] sm:$0xff] %v1224
        %s1229 = scalar_lea.vmem [#allocation10], 192
        %v1230 = vld [vmem:[%s1229] sm:$0xf]
        %v1231 = vld [vmem:[%s1229 + $0x4] sm:$0xf]
        %v1232 = vld [vmem:[%s1229 + $0x8] sm:$0xf]
        %v1233 = vld [vmem:[%s1229 + $0xc] sm:$0xf]
        %v1234 = vld [vmem:[%s1229 + $0x10] sm:$0xf]
        %v1235 = vld [vmem:[%s1229 + $0x14] sm:$0xf]
        %v1236 = vld [vmem:[%s1229 + $0x18] sm:$0xf]
        %v1237 = vld [vmem:[%s1229 + $0x1c] sm:$0xf]
        %v1238 = vld [vmem:[%s1229 + $0x20] sm:$0xf]
        %v1239 = vld [vmem:[%s1229 + $0x24] sm:$0xf]
        %v1240 = vld [vmem:[%s1229 + $0x28] sm:$0xf]
        %v1241 = vld [vmem:[%s1229 + $0x2c] sm:$0xf]
        %v1242 = vld [vmem:[%s1229 + $0x30] sm:$0xf]
        %v1243 = vld [vmem:[%s1229 + $0x34] sm:$0xf]
        %v1244 = vld [vmem:[%s1229 + $0x38] sm:$0xf]
        %v1245 = vld [vmem:[%s1229 + $0x3c] sm:$0xf]
        %v1262 = vunpack.c.l.b16 %v1230
        %v1263 = vunpack.c.l.b16 %v1231
        %v1264 = vunpack.c.l.b16 %v1232
        %v1265 = vunpack.c.l.b16 %v1233
        %v1266 = vunpack.c.l.b16 %v1234
        %v1267 = vunpack.c.l.b16 %v1235
        %v1268 = vunpack.c.l.b16 %v1236
        %v1269 = vunpack.c.l.b16 %v1237
        %v1270 = vunpack.c.l.b16 %v1238
        %v1271 = vunpack.c.l.b16 %v1239
        %v1272 = vunpack.c.l.b16 %v1240
        %v1273 = vunpack.c.l.b16 %v1241
        %v1274 = vunpack.c.l.b16 %v1242
        %v1275 = vunpack.c.l.b16 %v1243
        %v1276 = vunpack.c.l.b16 %v1244
        %v1277 = vunpack.c.l.b16 %v1245
        %v1278 = vpack.c.b16 %v1263, %v1262
        %v1279 = vpack.c.b16 %v1265, %v1264
        %v1280 = vpack.c.b16 %v1267, %v1266
        %v1281 = vpack.c.b16 %v1269, %v1268
        %v1282 = vpack.c.b16 %v1271, %v1270
        %v1283 = vpack.c.b16 %v1273, %v1272
        %v1284 = vpack.c.b16 %v1275, %v1274
        %v1285 = vpack.c.b16 %v1277, %v1276
        %1294 = vmatprep.subr.bf16.mxu0 0
        %1295 = vmatpush1.bf16.msra.mxu0 %v1285
        %1296 = vmatprep.subr.bf16.mxu0 0
        %1297 = vmatpush1.bf16.msra.mxu0 %v1284
        %1298 = vmatprep.subr.bf16.mxu0 0
        %1299 = vmatpush1.bf16.msra.mxu0 %v1283
        %1300 = vmatprep.subr.bf16.mxu0 0
        %1301 = vmatpush1.bf16.msra.mxu0 %v1282
        %1302 = vmatprep.subr.bf16.mxu0 0
        %1303 = vmatpush1.bf16.msra.mxu0 %v1281
        %1304 = vmatprep.subr.bf16.mxu0 0
        %1305 = vmatpush1.bf16.msra.mxu0 %v1280
        %1306 = vmatprep.subr.bf16.mxu0 0
        %1307 = vmatpush1.bf16.msra.mxu0 %v1279
        %1308 = vmatprep.subr.bf16.mxu0 0
        %1309 = vmatpush1.bf16.msra.mxu0 %v1278
        %1310 = vmatprep.subr.bf16.mxu0 0
        %1311 = vmatpush2.bf16.msra.mxu0 0
        %1312 = vmatprep.subr.bf16.mxu0 0
        %1313 = vmatpush2.bf16.msra.mxu0 0
        %1314 = vmatprep.subr.bf16.mxu0 0
        %1315 = vmatpush2.bf16.msra.mxu0 0
        %1316 = vmatprep.subr.bf16.mxu0 0
        %1317 = vmatpush2.bf16.msra.mxu0 0
        %1318 = vmatprep.subr.bf16.mxu0 0
        %1319 = vmatpush2.bf16.msra.mxu0 0
        %1320 = vmatprep.subr.bf16.mxu0 0
        %1321 = vmatpush2.bf16.msra.mxu0 0
        %1322 = vmatprep.subr.bf16.mxu0 0
        %1323 = vmatpush2.bf16.msra.mxu0 0
        %1324 = vmatprep.subr.bf16.mxu0 0
        %1325 = vmatpush2.bf16.msra.mxu0 0
        %1326 = vmatprep.mubr.bf16.mxu0 0
        %1327 = vmatmul.mubr.bf16.gmra.mxu0 %v810
        %v1328 = vpop.f32.mrf.mxu0
        %v1329 = vadd.f32 0.0, %v1328
        %v1330 = vpop.f32.mrf.mxu0
        %v1331 = vpop.f32.mrf.mxu0
        %v1332 = vadd.f32 0.0, %v1331
        %v1333 = vpop.f32.mrf.mxu0
        %1334 = vmatprep.mubr.bf16.mxu0 0
        %1335 = vmatmul.mubr.bf16.gmra.mxu0 %v811
        %v1336 = vpop.f32.mrf.mxu0
        %v1337 = vadd.f32 0.0, %v1336
        %v1338 = vpop.f32.mrf.mxu0
        %v1339 = vpop.f32.mrf.mxu0
        %v1340 = vadd.f32 0.0, %v1339
        %v1341 = vpop.f32.mrf.mxu0
        %1342 = vdwg.mxu0
        %v1343 = vld [vmem:[#allocation2] sm:$0xff]
        %v1344 = vld [vmem:[#allocation2 + $0x8] sm:$0xff]
        %v1345 = vld [vmem:[#allocation2 + $0x10] sm:$0xff]
        %v1346 = vld [vmem:[#allocation2 + $0x18] sm:$0xff]
        %v1347 = vld [vmem:[%s669] sm:$0xff]
        %v1348 = vld [vmem:[%s669 + $0x8] sm:$0xff]
        %v1349 = vld [vmem:[%s669 + $0x10] sm:$0xff]
        %v1350 = vld [vmem:[%s669 + $0x18] sm:$0xff]
        %v1351 = vmul.f32 %v1329, %v1347
        %v1352 = vmul.f32 %v1332, %v1348
        %v1353 = vmul.f32 %v1337, %v1349
        %v1354 = vmul.f32 %v1340, %v1350
        %v1355 = vadd.f32 %v1343, %v1351
        %v1356 = vadd.f32 %v1344, %v1352
        %v1357 = vadd.f32 %v1345, %v1353
        %v1358 = vadd.f32 %v1346, %v1354
        %1359 = vst [vmem:[#allocation2] sm:$0xff] %v1355
        %1360 = vst [vmem:[#allocation2 + $0x8] sm:$0xff] %v1356
        %1361 = vst [vmem:[#allocation2 + $0x10] sm:$0xff] %v1357
        %1362 = vst [vmem:[#allocation2 + $0x18] sm:$0xff] %v1358
        // Predicated region
        $region61: #{tpu_custom_call.1} parent=39 // pred_check
          %p1363 = pneg %p334
        $region62: #{tpu_custom_call.1} parent=39 // pred_check_branch
          %1365 = sbr.rel (%p1363) target = $region64
        $region63: #{tpu_custom_call.1} parent=39 // pred_region
          %v1366 = vld [vmem:[#allocation3] sm:$0xff]
          %v1367 = vld [vmem:[#allocation3 + $0x8] sm:$0xff]
          %v1368 = vld [vmem:[#allocation3 + $0x10] sm:$0xff]
          %v1369 = vld [vmem:[#allocation3 + $0x18] sm:$0xff]
          %v1370 = vld [vmem:[#allocation11] sm:$0xff]
          %v1371 = vld [vmem:[#allocation11 + $0x8] sm:$0xff]
          %v1372 = vld [vmem:[#allocation11 + $0x10] sm:$0xff]
          %v1373 = vld [vmem:[#allocation11 + $0x18] sm:$0xff]
          %v1374 = vld [vmem:[#allocation11 + $0x20] sm:$0xff]
          %v1375 = vld [vmem:[#allocation11 + $0x28] sm:$0xff]
          %v1376 = vld [vmem:[#allocation11 + $0x30] sm:$0xff]
          %v1377 = vld [vmem:[#allocation11 + $0x38] sm:$0xff]
          %v1378 = vld [vmem:[#allocation11 + $0x40] sm:$0xff]
          %v1379 = vld [vmem:[#allocation11 + $0x48] sm:$0xff]
          %v1380 = vld [vmem:[#allocation11 + $0x50] sm:$0xff]
          %v1381 = vld [vmem:[#allocation11 + $0x58] sm:$0xff]
          %v1382 = vld [vmem:[#allocation11 + $0x60] sm:$0xff]
          %v1383 = vld [vmem:[#allocation11 + $0x68] sm:$0xff]
          %v1384 = vld [vmem:[#allocation11 + $0x70] sm:$0xff]
          %v1385 = vld [vmem:[#allocation11 + $0x78] sm:$0xff]
          %1386 = vmatprep.subr.mxu0 0.0
          %1387 = vmatpush1.msra.mxu0 %v1385
          %1388 = vmatprep.subr.mxu0 0.0
          %1389 = vmatpush1.msra.mxu0 %v1384
          %1390 = vmatprep.subr.mxu0 0.0
          %1391 = vmatpush1.msra.mxu0 %v1383
          %1392 = vmatprep.subr.mxu0 0.0
          %1393 = vmatpush1.msra.mxu0 %v1382
          %1394 = vmatprep.subr.mxu0 0.0
          %1395 = vmatpush1.msra.mxu0 %v1381
          %1396 = vmatprep.subr.mxu0 0.0
          %1397 = vmatpush1.msra.mxu0 %v1380
          %1398 = vmatprep.subr.mxu0 0.0
          %1399 = vmatpush1.msra.mxu0 %v1379
          %1400 = vmatprep.subr.mxu0 0.0
          %1401 = vmatpush1.msra.mxu0 %v1378
          %1402 = vmatprep.subr.mxu0 0.0
          %1403 = vmatpush1.msra.mxu0 %v1377
          %1404 = vmatprep.subr.mxu0 0.0
          %1405 = vmatpush1.msra.mxu0 %v1376
          %1406 = vmatprep.subr.mxu0 0.0
          %1407 = vmatpush1.msra.mxu0 %v1375
          %1408 = vmatprep.subr.mxu0 0.0
          %1409 = vmatpush1.msra.mxu0 %v1374
          %1410 = vmatprep.subr.mxu0 0.0
          %1411 = vmatpush1.msra.mxu0 %v1373
          %1412 = vmatprep.subr.mxu0 0.0
          %1413 = vmatpush1.msra.mxu0 %v1372
          %1414 = vmatprep.subr.mxu0 0.0
          %1415 = vmatpush1.msra.mxu0 %v1371
          %1416 = vmatprep.subr.mxu0 0.0
          %1417 = vmatpush1.msra.mxu0 %v1370
          %1418 = vmatprep.subr.mxu0 0.0
          %1419 = vmatpush2.msra.mxu0 0.0
          %1420 = vmatprep.subr.mxu0 0.0
          %1421 = vmatpush2.msra.mxu0 0.0
          %1422 = vmatprep.subr.mxu0 0.0
          %1423 = vmatpush2.msra.mxu0 0.0
          %1424 = vmatprep.subr.mxu0 0.0
          %1425 = vmatpush2.msra.mxu0 0.0
          %1426 = vmatprep.subr.mxu0 0.0
          %1427 = vmatpush2.msra.mxu0 0.0
          %1428 = vmatprep.subr.mxu0 0.0
          %1429 = vmatpush2.msra.mxu0 0.0
          %1430 = vmatprep.subr.mxu0 0.0
          %1431 = vmatpush2.msra.mxu0 0.0
          %1432 = vmatprep.subr.mxu0 0.0
          %1433 = vmatpush2.msra.mxu0 0.0
          %1434 = vmatprep.subr.mxu0 0.0
          %1435 = vmatpush2.msra.mxu0 0.0
          %1436 = vmatprep.subr.mxu0 0.0
          %1437 = vmatpush2.msra.mxu0 0.0
          %1438 = vmatprep.subr.mxu0 0.0
          %1439 = vmatpush2.msra.mxu0 0.0
          %1440 = vmatprep.subr.mxu0 0.0
          %1441 = vmatpush2.msra.mxu0 0.0
          %1442 = vmatprep.subr.mxu0 0.0
          %1443 = vmatpush2.msra.mxu0 0.0
          %1444 = vmatprep.subr.mxu0 0.0
          %1445 = vmatpush2.msra.mxu0 0.0
          %1446 = vmatprep.subr.mxu0 0.0
          %1447 = vmatpush2.msra.mxu0 0.0
          %1448 = vmatprep.subr.mxu0 0.0
          %1449 = vmatpush2.msra.mxu0 0.0
          %1450 = vmatprep.mubr.f32.mxu0 0.0
          %1451 = vmatmul.mubr.f32.gmra.mxu0 %v1366
          %v1452 = vpop.f32.mrf.mxu0
          %v1453 = vadd.f32 0.0, %v1452
          %v1454 = vpop.f32.mrf.mxu0
          %1455 = vmatprep.mubr.f32.mxu0 0.0
          %1456 = vmatmul.mubr.f32.gmra.mxu0 %v1367
          %v1457 = vpop.f32.mrf.mxu0
          %v1458 = vadd.f32 0.0, %v1457
          %v1459 = vpop.f32.mrf.mxu0
          %1460 = vmatprep.mubr.f32.mxu0 0.0
          %1461 = vmatmul.mubr.f32.gmra.mxu0 %v1368
          %v1462 = vpop.f32.mrf.mxu0
          %v1463 = vadd.f32 0.0, %v1462
          %v1464 = vpop.f32.mrf.mxu0
          %1465 = vmatprep.mubr.f32.mxu0 0.0
          %1466 = vmatmul.mubr.f32.gmra.mxu0 %v1369
          %v1467 = vpop.f32.mrf.mxu0
          %v1468 = vadd.f32 0.0, %v1467
          %v1469 = vpop.f32.mrf.mxu0
          %1470 = vdwg.mxu0
          %v1471 = vrcp.pop %v1453
          %v1472 = vrcp.pop %v1458
          %v1473 = vrcp.pop %v1463
          %v1474 = vrcp.pop %v1468
          %v1475 = vmul.f32 %v1453, %v1471
          %v1476 = vmul.f32 %v1458, %v1472
          %v1477 = vmul.f32 %v1463, %v1473
          %v1478 = vmul.f32 %v1468, %v1474
          %v1479 = vsub.f32 2.0, %v1475
          %v1480 = vsub.f32 2.0, %v1476
          %v1481 = vsub.f32 2.0, %v1477
          %v1482 = vsub.f32 2.0, %v1478
          %v1483 = vmul.f32 %v1471, %v1479
          %v1484 = vmul.f32 %v1472, %v1480
          %v1485 = vmul.f32 %v1473, %v1481
          %v1486 = vmul.f32 %v1474, %v1482
          %v1487 = vld [vmem:[#allocation2] sm:$0xff]
          %v1488 = vld [vmem:[#allocation2 + $0x8] sm:$0xff]
          %v1489 = vld [vmem:[#allocation2 + $0x10] sm:$0xff]
          %v1490 = vld [vmem:[#allocation2 + $0x18] sm:$0xff]
          %v1491 = vmul.f32 %v1487, %v1483
          %v1492 = vmul.f32 %v1488, %v1484
          %v1493 = vmul.f32 %v1489, %v1485
          %v1494 = vmul.f32 %v1490, %v1486
          %1495 = vst [vmem:[%s329] sm:$0xff] %v1491
          %1496 = vst [vmem:[%s329 + $0x8] sm:$0xff] %v1492
          %1497 = vst [vmem:[%s329 + $0x10] sm:$0xff] %v1493
          %1498 = vst [vmem:[%s329 + $0x18] sm:$0xff] %v1494
        $region64: #{tpu_custom_call.1} parent=39 // pred_fallthru
          _
        %s1499 = sand.u32 %s157, 1
        %s1500 = scalar_lea.sflag [#allocation7], %s1499
        %s1501 = sand.u32 %s157, 1
        %s1502 = smul.addr %s1501, 32
        %s1503 = scalar_lea.vmem [#allocation13], %s1502
        // Predicated region
        $region65: #{tpu_custom_call.1} parent=39 // pred_check
          %p1504 = pneg %p167
        $region66: #{tpu_custom_call.1} parent=39 // pred_check_branch
          %1506 = sbr.rel (%p1504) target = $region68
        $region67: #{tpu_custom_call.1} parent=39 // pred_region
          %s1507 = smul.u32 4, %s29
          %s1509 = ssub.s32 512, 512
          %1510 = vsyncadd %s1500, %s1509
          %s1511 = smul.addr %s1507, 128
          %s1512 = scalar_lea.hbm %s5, %s1511
          %s1513 = sshll.u32 %s1503, 4
          %s1514 = int_to_ptr.vmem [resolvable:$true] %s1513
          %1519 = dma.vmem_to_hbm [thread:$0]  %s1514, 512, %s1512, %s1500, 128, 128, 8
        $region68: #{tpu_custom_call.1} parent=39 // pred_fallthru
          _
      $region40: #{tpu_custom_call.1} parent=5 // pred_fallthru
        _
      %p1520 = scmp.le.s32.totalorder 2, %s20
      // Predicated region
      $region69: #{tpu_custom_call.1} parent=5 // pred_check
        %p1521 = pneg %p1520
      $region70: #{tpu_custom_call.1} parent=5 // pred_check_branch
        %1523 = sbr.rel (%p1521) target = $region72
      $region71: #{tpu_custom_call.1} parent=5 // pred_region
        %s1524 = ssub.s32 %s20, 2
        // Predicated region
        $region73: #{tpu_custom_call.1} parent=71 // pred_check
          %p1525 = pneg %p173
        $region74: #{tpu_custom_call.1} parent=71 // pred_check_branch
          %1527 = sbr.rel (%p1525) target = $region76
        $region75: #{tpu_custom_call.1} parent=71 // pred_region
          %s1528 = sand.u32 %s158, 1
          %s1529 = scalar_lea.sflag [#allocation7], %s1528
          %s1530 = sand.u32 %s158, 1
          %s1531 = smul.addr %s1530, 32
          %s1532 = scalar_lea.vmem [#allocation13], %s1531
          %1533 = dma.done %s1529, 512
        $region76: #{tpu_custom_call.1} parent=71 // pred_fallthru
          _
      $region72: #{tpu_custom_call.1} parent=5 // pred_fallthru
        _
    $region6: #{tpu_custom_call.1} parent=1 // loop_footer
      %s24 = sadd.s32 1, %s20
    $region7: #{tpu_custom_call.1} parent=1 // loop_footer_branch
      %19 = sbr.rel target = $region3
    $region8: #{tpu_custom_call.1} parent=1 // loop_exit
      _
    %1534 = vsyncpa [#allocation6], 1
    %s1535 = scalar_lea.sflag [#allocation6], 1
    %1536 = vsyncpa %s1535, 1
    %1537 = vsyncpa [#allocation9], 1
    %1538 = vsyncpa [#allocation12], 1
    %1539 = vsyncpa [#allocation7], 1
    %s1540 = scalar_lea.sflag [#allocation7], 1
    %1541 = vsyncpa %s1540, 1

</llo_original>
